<compile_context>
chip_gen: v5e
topology: v5e:2x2
jax: 0.10.0
libtpu: 0.0.40
codegen_flags: <defaults>
</compile_context>

<pallas_src>
import numpy as np
import jax
import jax.numpy as jnp
from jax.experimental import pallas as pl
from jax.experimental.pallas import tpu as pltpu

# ---------------- configuration (small, consistent with the module) ----------------
B = 2            # batch
N_ATOMS = 8      # num atoms
T = 8            # num timesteps
D_IN = 32        # n_in_node
RNN_HID = 32     # rnn_hid
GNN_HID = (32, 32)     # gnn_hid_list
NUM_EDGE_TYPES = 3     # Et; edge types 1..Et-1 are aggregated
PRED_STEPS = 4
DO_PROB = 0.0    # dropout(p=0.0) is the identity
MXU_DTYPE = jnp.bfloat16   # matmul operand dtype (f32 accumulation)
# TODO(synk): dropout with p>0 (training mode) is not implemented; module is built with do_prob=0.0.


# ---------------------------------- Pallas kernel ----------------------------------
def _decoder_kernel(gt_ref, adj2_ref, wg_ref, wp_ref, bias_ref, out_ref, z_ref):
    n_steps, bn, d = out_ref.shape
    h = wp_ref.shape[-1]
    gt_rows = gt_ref.shape[0]
    lp = MXU_DTYPE

    def mm(a, b):
        # Operands are already in the MXU dtype; accumulate in f32.
        return jnp.dot(a, b, preferred_element_type=jnp.float32)

    # ---- tiny resident operands: load once, reuse across all unrolled steps ----------
    gw0 = wp_ref[0 * h:1 * h, :]                 # packed (5H, H) bf16 weights
    gw1 = wp_ref[1 * h:2 * h, :]
    wf1 = wp_ref[2 * h:3 * h, :]
    wf2 = wp_ref[3 * h:4 * h, :]
    wf3 = wp_ref[4 * h:5 * h, :]
    w_gate = wg_ref[...]                         # (2H, 4H) block-structured gate weight
    adj2 = adj2_ref[...]                         # (n_gt*BN, n_gt*BN) block-diag adjacency
    adj = adj2_ref[0:bn, 0:bn]                   # (BN, BN) single-frame block (top-left)
    bias = bias_ref[...]                         # (2, 4H) f32 packed bias rows

    # ---- hoisted bias broadcasts / splits (done once, outside the step loop) ---------
    b_gate = jnp.broadcast_to(bias[0:1, :], (bn, 4 * h))
    b_gate_gt = jnp.broadcast_to(bias[0:1, :], (gt_rows, 4 * h))
    bf1 = jnp.broadcast_to(bias[1:2, 0:h], (bn, h))
    bf2 = jnp.broadcast_to(bias[1:2, h:2 * h], (bn, h))
    bf3 = jnp.broadcast_to(bias[1:2, 2 * h:2 * h + d], (bn, d))

    # ---- teacher-forced frames: GNN + fused gate matmul hoisted out of the recurrence --
    # (batched over all n_gt ground-truth frames; independent of the recurrent chain)
    gt = gt_ref[...]                             # (n_gt*BN, D) f32
    gt_lp = gt.astype(lp)
    xg = jax.nn.relu(mm(adj2, mm(gt_lp, gw0).astype(lp)))
    xg = jax.nn.relu(mm(adj2, mm(xg.astype(lp), gw1).astype(lp)))
    z_ref[:, 0:h] = gt_lp                        # z = [rnn_in | x] lane-packed in VMEM scratch
    z_ref[:, h:2 * h] = xg.astype(lp)
    g_gt = mm(z_ref[...], w_gate) + b_gate_gt    # (n_gt*BN, 4H) gate pre-activations

    # ---- recurrent loop (fully unrolled; teacher-forcing branch is static per step) ----
    hidden = jnp.zeros((bn, h), jnp.float32)     # rnn hidden (loop-carried)
    prev = jnp.zeros((bn, d), jnp.float32)       # previous prediction (loop-carried)
    for step in range(n_steps):
        if step % PRED_STEPS == 0:               # teacher step: GNN + gate matmul precomputed
            gi = step // PRED_STEPS
            rnn_in = gt[gi * bn:(gi + 1) * bn]
            g = g_gt[gi * bn:(gi + 1) * bn]
        else:                                    # free-running step
            rnn_in = prev
            rnn_in_lp = rnn_in.astype(lp)
            z_ref[0:bn, 0:h] = rnn_in_lp         # input half of z, off the GNN chain
            # GNN message passing: x <- relu( A_blockdiag @ (x @ W_l) )  (dropout(p=0) == id)
            x = jax.nn.relu(mm(adj, mm(rnn_in_lp, gw0).astype(lp)))
            x = jax.nn.relu(mm(adj, mm(x.astype(lp), gw1).astype(lp)))
            z_ref[0:bn, h:2 * h] = x.astype(lp)
            # ONE lane-dense (BN,2H)x(2H,4H) matmul -> [r_pre | i_pre | gi_n | gh_n]
            g = mm(z_ref[0:bn, :], w_gate) + b_gate

        ri = jax.nn.sigmoid(g[:, 0:2 * h])       # merged r|i sigmoid
        r, i = ri[:, 0:h], ri[:, h:2 * h]
        n = jnp.tanh(g[:, 2 * h:3 * h] + r * g[:, 3 * h:4 * h])
        hidden = (1.0 - i) * n + i * hidden

        # Output MLP with residual connection.
        p = jax.nn.relu(mm(hidden.astype(lp), wf1) + bf1)
        p = jax.nn.relu(mm(p.astype(lp), wf2) + bf2)
        p = mm(p.astype(lp), wf3) + bf3
        pred = rnn_in + p

        out_ref[step] = pred
        prev = pred


# ------------------------------------ glue (JAX) ------------------------------------
def _summed_blockdiag_adjacency(sparse_edges, n_atoms):
    """sum_{e>=1} symmetric dense adjacency, block-diagonalized over batch -> (B*N, B*N) f32."""
    b = sparse_edges.shape[0]
    iu, ju = np.triu_indices(n_atoms, k=1)
    upper = jnp.sum(sparse_edges[:, :, 1:], axis=-1)      # skip edge type 0 (no-edge)
    A = jnp.zeros((b, n_atoms, n_atoms), jnp.float32).at[:, iu, ju].set(upper)
    A = A + jnp.swapaxes(A, 1, 2)                         # (B, N, N) symmetric
    blk = jnp.zeros((b, n_atoms, b, n_atoms), jnp.float32)
    blk = blk.at[jnp.arange(b), :, jnp.arange(b), :].set(A)
    return blk.reshape(b * n_atoms, b * n_atoms)


def rnn_reconstruction_decoder(inputs, sparse_edges, params):
    """inputs: (B, N, T, D);  sparse_edges: (B, E, Et).  Returns (B, N, T-1, D)."""
    Bn, Nn, Tn, Dn = inputs.shape
    BN = Bn * Nn
    H = RNN_HID

    # Ground-truth frames consumed by teacher forcing, stacked & flattened: (n_gt*B*N, D).
    gt_steps = np.arange(0, Tn - 1, PRED_STEPS)
    n_gt = len(gt_steps)
    gt = jnp.transpose(inputs[:, :, gt_steps, :], (2, 0, 1, 3))
    gt = gt.reshape(n_gt * BN, Dn).astype(jnp.float32)

    # Summed edge-type adjacency (block-diag over batch), replicated block-diagonally over the
    # n_gt teacher frames for the batched in-kernel precompute.  Top-left (BN,BN) block is the
    # per-step adjacency used inside the recurrence.
    adj = _summed_blockdiag_adjacency(sparse_edges, Nn)
    adj2 = jnp.zeros((n_gt * BN, n_gt * BN), jnp.float32)
    for gidx in range(n_gt):
        adj2 = adj2.at[gidx * BN:(gidx + 1) * BN, gidx * BN:(gidx + 1) * BN].set(adj)
    adj2 = adj2.astype(MXU_DTYPE)

    # Fused block-structured gate weight (2H, 4H) = [[w_ir w_ii w_in 0], [w_hr w_hi 0 w_hh]].
    zH = jnp.zeros((H, H), jnp.float32)
    w_gate = jnp.concatenate([
        jnp.concatenate([params['w_ir'], params['w_ii'], params['w_in'], zH], axis=1),
        jnp.concatenate([params['w_hr'], params['w_hi'], zH, params['w_hh']], axis=1),
    ], axis=0).astype(MXU_DTYPE)

    # The five (H,H)-sized weights packed along rows: [gnn_w0; gnn_w1; w_f1; w_f2; w_f3].
    w_pack = jnp.concatenate([params['gnn_w0'], params['gnn_w1'],
                              params['w_f1'], params['w_f2'], params['w_f3']],
                             axis=0).astype(MXU_DTYPE)

    # Bias rows packed as (2, 4H) f32: row 0 = [b_ir | b_ii | b_in | 0] (gate pre-activation),
    # row 1 = [b_f1 | b_f2 | b_f3 | 0] (out-MLP).
    z1 = jnp.zeros((1, H), jnp.float32)
    bias = jnp.concatenate([
        jnp.concatenate([params['b_ir'], params['b_ii'], params['b_in'], z1], axis=1),
        jnp.concatenate([params['b_f1'], params['b_f2'], params['b_f3'],
                         jnp.zeros((1, 4 * H - 2 * H - Dn), jnp.float32)], axis=1),
    ], axis=0)

    operands = [gt, adj2, w_gate, w_pack, bias]

    def full_spec(a):
        nd = a.ndim
        return pl.BlockSpec(a.shape, lambda i, _nd=nd: (0,) * _nd)

    out_t = pl.pallas_call(
        _decoder_kernel,
        out_shape=jax.ShapeDtypeStruct((Tn - 1, BN, Dn), jnp.float32),
        grid=(1,),          # single invocation: the recurrence is unrolled inside the kernel
        in_specs=[full_spec(a) for a in operands],
        out_specs=pl.BlockSpec((Tn - 1, BN, Dn), lambda i: (0, 0, 0)),
        scratch_shapes=[pltpu.VMEM((n_gt * BN, 2 * H), MXU_DTYPE)],   # z = [rnn_in | x] packer
        compiler_params=pltpu.CompilerParams(dimension_semantics=("arbitrary",)),
    )(*operands)

    # (T-1, B*N, D) -> (B, N, T-1, D)
    return jnp.transpose(out_t.reshape(Tn - 1, Bn, Nn, Dn), (1, 2, 0, 3))


# ------------------------------ deterministic parameters ------------------------------
def init_params(key):
    def xavier(k, shape):
        fan_in, fan_out = shape
        std = np.sqrt(2.0 / (fan_in + fan_out))
        return (std * jax.random.normal(k, shape, jnp.float32)).astype(jnp.float32)

    ks = iter(jax.random.split(key, 24))
    p = {}
    p['gnn_w0'] = xavier(next(ks), (D_IN, GNN_HID[0]))
    p['gnn_w1'] = xavier(next(ks), (GNN_HID[0], GNN_HID[1]))
    # nn.Linear weights stored pre-transposed as (in, out); biases as (1, out).
    p['w_ir'] = xavier(next(ks), (GNN_HID[-1], RNN_HID))
    p['b_ir'] = 0.1 * jax.random.normal(next(ks), (1, RNN_HID), jnp.float32)
    p['w_ii'] = xavier(next(ks), (GNN_HID[-1], RNN_HID))
    p['b_ii'] = 0.1 * jax.random.normal(next(ks), (1, RNN_HID), jnp.float32)
    p['w_in'] = xavier(next(ks), (GNN_HID[-1], RNN_HID))
    p['b_in'] = 0.1 * jax.random.normal(next(ks), (1, RNN_HID), jnp.float32)
    p['w_hr'] = xavier(next(ks), (RNN_HID, RNN_HID))
    p['w_hi'] = xavier(next(ks), (RNN_HID, RNN_HID))
    p['w_hh'] = xavier(next(ks), (RNN_HID, RNN_HID))
    p['w_f1'] = xavier(next(ks), (RNN_HID, RNN_HID))
    p['b_f1'] = 0.1 * jax.random.normal(next(ks), (1, RNN_HID), jnp.float32)
    p['w_f2'] = xavier(next(ks), (RNN_HID, RNN_HID))
    p['b_f2'] = 0.1 * jax.random.normal(next(ks), (1, RNN_HID), jnp.float32)
    p['w_f3'] = xavier(next(ks), (RNN_HID, D_IN))
    p['b_f3'] = 0.1 * jax.random.normal(next(ks), (1, D_IN), jnp.float32)
    return p


# --------------------------------- pure-JAX reference ---------------------------------
def reference_forward(inputs, sparse_edges, params, mxu_dtype=jnp.float32):
    """Pure-JAX reference of the module forward (per-step loop, per-gate linears).

    `mxu_dtype=jnp.bfloat16` mirrors the kernel's bf16-operand / f32-accumulate matmul
    precision (elementwise math stays f32) so the comparison isolates kernel bugs from the
    intentional mixed-precision choice.  Pre-summing the edge-type adjacencies is an exact
    algebraic identity to the module's per-type loop because y = x @ W is shared across types;
    the kernel's fused / batched matmuls differ only in f32 accumulation grouping.
    """
    Bn, Nn, Tn, Dn = inputs.shape
    iu, ju = np.triu_indices(Nn, k=1)
    upper = jnp.sum(sparse_edges[:, :, 1:], axis=-1)
    A = jnp.zeros((Bn, Nn, Nn), jnp.float32).at[:, iu, ju].set(upper)
    A = (A + jnp.swapaxes(A, 1, 2)).astype(mxu_dtype)

    def lin(v, w, b=None):
        y = jnp.einsum('bnd,de->bne', v.astype(mxu_dtype), w.astype(mxu_dtype),
                       preferred_element_type=jnp.float32)
        return y + b if b is not None else y

    def agg(y):
        return jnp.einsum('bij,bjd->bid', A, y.astype(mxu_dtype),
                          preferred_element_type=jnp.float32)

    hidden = jnp.zeros((Bn, Nn, RNN_HID), jnp.float32)
    preds = []
    for step in range(Tn - 1):
        rnn_in = inputs[:, :, step, :] if step % PRED_STEPS == 0 else preds[step - 1]
        x = rnn_in
        for w in (params['gnn_w0'], params['gnn_w1']):
            x = jax.nn.relu(agg(lin(x, w)))
        r = jax.nn.sigmoid(lin(rnn_in, params['w_ir'], params['b_ir']) + lin(x, params['w_hr']))
        i = jax.nn.sigmoid(lin(rnn_in, params['w_ii'], params['b_ii']) + lin(x, params['w_hi']))
        n = jnp.tanh(lin(rnn_in, params['w_in'], params['b_in']) + r * lin(x, params['w_hh']))
        hidden = (1.0 - i) * n + i * hidden
        p = jax.nn.relu(lin(hidden, params['w_f1'], params['b_f1']))
        p = jax.nn.relu(lin(p, params['w_f2'], params['b_f2']))
        p = lin(p, params['w_f3'], params['b_f3'])
        preds.append(rnn_in + p)
    return jnp.stack(preds, axis=2)


# ---------------------------------------- main ----------------------------------------
if __name__ == "__main__":
    key = jax.random.PRNGKey(0)
    k_in, k_edge, k_par = jax.random.split(key, 3)

    inputs = jax.random.normal(k_in, (B, N_ATOMS, T, D_IN), jnp.float32)
    n_edges = N_ATOMS * (N_ATOMS - 1) // 2
    edge_logits = jax.random.normal(k_edge, (B, n_edges, NUM_EDGE_TYPES), jnp.float32)
    sparse_edges = jax.nn.softmax(edge_logits, axis=-1)   # edge-type probabilities
    params = init_params(k_par)

    out = rnn_reconstruction_decoder(inputs, sparse_edges, params)
    out = jax.block_until_ready(out)
    assert out.shape == (B, N_ATOMS, T - 1, D_IN), out.shape

    ref = reference_forward(inputs, sparse_edges, params, mxu_dtype=MXU_DTYPE)
    assert bool(jnp.allclose(out, ref, rtol=5e-3, atol=5e-3)), "mismatch vs pure-JAX reference"

    print("KERNEL_OK")
</pallas_src>

<mosaic_0001>
module attributes {stable_mosaic.version = 11 : i64} {
  func.func @_decoder_kernel(%arg0: i32, %arg1: memref<32x32xf32, #tpu.memory_space<vmem>>, %arg2: memref<32x32xbf16, #tpu.memory_space<vmem>>, %arg3: memref<64x128xbf16, #tpu.memory_space<vmem>>, %arg4: memref<160x32xbf16, #tpu.memory_space<vmem>>, %arg5: memref<2x128xf32, #tpu.memory_space<vmem>>, %arg6: memref<7x16x32xf32, #tpu.memory_space<vmem>>, %arg7: memref<32x64xbf16, #tpu.memory_space<vmem>>) attributes {dimension_semantics = [#tpu.dimension_semantics<arbitrary>], iteration_bounds = array<i64: 1>, scalar_prefetch = 0 : i64, scratch_operands = 1 : i64, tpu.core_type = #tpu.core_type<tc>, window_params = [{pipeline_mode = #tpu.pipeline_mode<synchronous>, transform_indices = @transform_0, window_bounds = array<i64: 32, 32>}, {pipeline_mode = #tpu.pipeline_mode<synchronous>, transform_indices = @transform_1, window_bounds = array<i64: 32, 32>}, {pipeline_mode = #tpu.pipeline_mode<synchronous>, transform_indices = @transform_2, window_bounds = array<i64: 64, 128>}, {pipeline_mode = #tpu.pipeline_mode<synchronous>, transform_indices = @transform_3, window_bounds = array<i64: 160, 32>}, {pipeline_mode = #tpu.pipeline_mode<synchronous>, transform_indices = @transform_4, window_bounds = array<i64: 2, 128>}, {pipeline_mode = #tpu.pipeline_mode<synchronous>, transform_indices = @transform_5, window_bounds = array<i64: 7, 16, 32>}]} {
    %c0 = arith.constant 0 : index
    %c0_0 = arith.constant 0 : index
    %0 = vector.load %arg4[%c0, %c0_0] : memref<160x32xbf16, #tpu.memory_space<vmem>>, vector<32x32xbf16>
    %c32 = arith.constant 32 : index
    %c0_1 = arith.constant 0 : index
    %1 = vector.load %arg4[%c32, %c0_1] : memref<160x32xbf16, #tpu.memory_space<vmem>>, vector<32x32xbf16>
    %c64 = arith.constant 64 : index
    %c0_2 = arith.constant 0 : index
    %2 = vector.load %arg4[%c64, %c0_2] : memref<160x32xbf16, #tpu.memory_space<vmem>>, vector<32x32xbf16>
    %c96 = arith.constant 96 : index
    %c0_3 = arith.constant 0 : index
    %3 = vector.load %arg4[%c96, %c0_3] : memref<160x32xbf16, #tpu.memory_space<vmem>>, vector<32x32xbf16>
    %c128 = arith.constant 128 : index
    %c0_4 = arith.constant 0 : index
    %4 = vector.load %arg4[%c128, %c0_4] : memref<160x32xbf16, #tpu.memory_space<vmem>>, vector<32x32xbf16>
    %c0_5 = arith.constant 0 : index
    %c0_6 = arith.constant 0 : index
    %5 = vector.load %arg3[%c0_5, %c0_6] : memref<64x128xbf16, #tpu.memory_space<vmem>>, vector<64x128xbf16>
    %c0_7 = arith.constant 0 : index
    %c0_8 = arith.constant 0 : index
    %6 = vector.load %arg2[%c0_7, %c0_8] : memref<32x32xbf16, #tpu.memory_space<vmem>>, vector<32x32xbf16>
    %c0_9 = arith.constant 0 : index
    %c0_10 = arith.constant 0 : index
    %7 = vector.load %arg2[%c0_9, %c0_10] : memref<32x32xbf16, #tpu.memory_space<vmem>>, vector<16x16xbf16>
    %c0_11 = arith.constant 0 : index
    %c0_12 = arith.constant 0 : index
    %8 = vector.load %arg5[%c0_11, %c0_12] : memref<2x128xf32, #tpu.memory_space<vmem>>, vector<2x128xf32>
    %9 = vector.extract_strided_slice %8 {offsets = [0, 0], sizes = [1, 128], strides = [1, 1]} : vector<2x128xf32> to vector<1x128xf32>
    %10 = vector.shape_cast %9 : vector<1x128xf32> to vector<1x128xf32>
    %11 = vector.broadcast %10 : vector<1x128xf32> to vector<16x128xf32>
    %12 = vector.extract_strided_slice %8 {offsets = [0, 0], sizes = [1, 128], strides = [1, 1]} : vector<2x128xf32> to vector<1x128xf32>
    %13 = vector.shape_cast %12 : vector<1x128xf32> to vector<1x128xf32>
    %14 = vector.broadcast %13 : vector<1x128xf32> to vector<32x128xf32>
    %15 = vector.extract_strided_slice %8 {offsets = [1, 0], sizes = [1, 32], strides = [1, 1]} : vector<2x128xf32> to vector<1x32xf32>
    %16 = vector.shape_cast %15 : vector<1x32xf32> to vector<1x32xf32>
    %17 = vector.broadcast %16 : vector<1x32xf32> to vector<16x32xf32>
    %18 = vector.extract_strided_slice %8 {offsets = [1, 32], sizes = [1, 32], strides = [1, 1]} : vector<2x128xf32> to vector<1x32xf32>
    %19 = vector.shape_cast %18 : vector<1x32xf32> to vector<1x32xf32>
    %20 = vector.broadcast %19 : vector<1x32xf32> to vector<16x32xf32>
    %21 = vector.extract_strided_slice %8 {offsets = [1, 64], sizes = [1, 32], strides = [1, 1]} : vector<2x128xf32> to vector<1x32xf32>
    %22 = vector.shape_cast %21 : vector<1x32xf32> to vector<1x32xf32>
    %23 = vector.broadcast %22 : vector<1x32xf32> to vector<16x32xf32>
    %c0_13 = arith.constant 0 : index
    %c0_14 = arith.constant 0 : index
    %24 = vector.load %arg1[%c0_13, %c0_14] : memref<32x32xf32, #tpu.memory_space<vmem>>, vector<32x32xf32>
    %25 = arith.truncf %24 : vector<32x32xf32> to vector<32x32xbf16>
    %cst = arith.constant dense<0.000000e+00> : vector<32x32xf32>
    %26 = tpu.matmul %25, %0, %cst {dimension_numbers = #tpu.dot_dimension_numbers<[1], [0], [0], [1], [0, 0, 1, 1], [], []>} : vector<32x32xbf16>, vector<32x32xbf16>, vector<32x32xf32> -> vector<32x32xf32>
    %27 = arith.truncf %26 : vector<32x32xf32> to vector<32x32xbf16>
    %cst_15 = arith.constant dense<0.000000e+00> : vector<32x32xf32>
    %28 = tpu.matmul %6, %27, %cst_15 {dimension_numbers = #tpu.dot_dimension_numbers<[1], [0], [0], [1], [0, 0, 1, 1], [], []>} : vector<32x32xbf16>, vector<32x32xbf16>, vector<32x32xf32> -> vector<32x32xf32>
    %cst_16 = arith.constant 0.000000e+00 : f32
    %29 = vector.broadcast %cst_16 : f32 to vector<32x32xf32>
    %30 = arith.maximumf %28, %29 : vector<32x32xf32>
    %31 = arith.truncf %30 : vector<32x32xf32> to vector<32x32xbf16>
    %cst_17 = arith.constant dense<0.000000e+00> : vector<32x32xf32>
    %32 = tpu.matmul %31, %1, %cst_17 {dimension_numbers = #tpu.dot_dimension_numbers<[1], [0], [0], [1], [0, 0, 1, 1], [], []>} : vector<32x32xbf16>, vector<32x32xbf16>, vector<32x32xf32> -> vector<32x32xf32>
    %33 = arith.truncf %32 : vector<32x32xf32> to vector<32x32xbf16>
    %cst_18 = arith.constant dense<0.000000e+00> : vector<32x32xf32>
    %34 = tpu.matmul %6, %33, %cst_18 {dimension_numbers = #tpu.dot_dimension_numbers<[1], [0], [0], [1], [0, 0, 1, 1], [], []>} : vector<32x32xbf16>, vector<32x32xbf16>, vector<32x32xf32> -> vector<32x32xf32>
    %cst_19 = arith.constant 0.000000e+00 : f32
    %35 = vector.broadcast %cst_19 : f32 to vector<32x32xf32>
    %36 = arith.maximumf %34, %35 : vector<32x32xf32>
    %c0_20 = arith.constant 0 : index
    %c0_21 = arith.constant 0 : index
    %37 = vector.load %arg7[%c0_20, %c0_21] : memref<32x64xbf16, #tpu.memory_space<vmem>>, vector<32x32xbf16>
    tpu.vector_store %arg7[%c0_20, %c0_21], %25 {strides = array<i32>} : memref<32x64xbf16, #tpu.memory_space<vmem>>, vector<32x32xbf16>,
    %38 = arith.truncf %36 : vector<32x32xf32> to vector<32x32xbf16>
    %c0_22 = arith.constant 0 : index
    %c32_23 = arith.constant 32 : index
    %39 = vector.load %arg7[%c0_22, %c32_23] : memref<32x64xbf16, #tpu.memory_space<vmem>>, vector<32x32xbf16>
    tpu.vector_store %arg7[%c0_22, %c32_23], %38 {strides = array<i32>} : memref<32x64xbf16, #tpu.memory_space<vmem>>, vector<32x32xbf16>,
    %c0_24 = arith.constant 0 : index
    %c0_25 = arith.constant 0 : index
    %40 = vector.load %arg7[%c0_24, %c0_25] : memref<32x64xbf16, #tpu.memory_space<vmem>>, vector<32x64xbf16>
    %cst_26 = arith.constant dense<0.000000e+00> : vector<32x128xf32>
    %41 = tpu.matmul %40, %5, %cst_26 {dimension_numbers = #tpu.dot_dimension_numbers<[1], [0], [0], [1], [0, 0, 1, 1], [], []>} : vector<32x64xbf16>, vector<64x128xbf16>, vector<32x128xf32> -> vector<32x128xf32>
    %42 = arith.addf %41, %14 : vector<32x128xf32>
    %cst_27 = arith.constant 0.000000e+00 : f32
    %43 = vector.broadcast %cst_27 : f32 to vector<16x32xf32>
    %44 = vector.extract_strided_slice %24 {offsets = [0, 0], sizes = [16, 32], strides = [1, 1]} : vector<32x32xf32> to vector<16x32xf32>
    %45 = vector.extract_strided_slice %42 {offsets = [0, 0], sizes = [16, 128], strides = [1, 1]} : vector<32x128xf32> to vector<16x128xf32>
    %46 = vector.extract_strided_slice %45 {offsets = [0, 0], sizes = [16, 64], strides = [1, 1]} : vector<16x128xf32> to vector<16x64xf32>
    %47 = arith.negf %46 : vector<16x64xf32>
    %48 = math.exp %47 : vector<16x64xf32>
    %cst_28 = arith.constant 1.000000e+00 : f32
    %49 = vector.broadcast %cst_28 : f32 to vector<16x64xf32>
    %50 = arith.addf %49, %48 : vector<16x64xf32>
    %51 = arith.divf %49, %50 : vector<16x64xf32>
    %52 = vector.extract_strided_slice %51 {offsets = [0, 0], sizes = [16, 32], strides = [1, 1]} : vector<16x64xf32> to vector<16x32xf32>
    %53 = vector.extract_strided_slice %51 {offsets = [0, 32], sizes = [16, 32], strides = [1, 1]} : vector<16x64xf32> to vector<16x32xf32>
    %54 = vector.extract_strided_slice %45 {offsets = [0, 64], sizes = [16, 32], strides = [1, 1]} : vector<16x128xf32> to vector<16x32xf32>
    %55 = vector.extract_strided_slice %45 {offsets = [0, 96], sizes = [16, 32], strides = [1, 1]} : vector<16x128xf32> to vector<16x32xf32>
    %56 = arith.mulf %52, %55 : vector<16x32xf32>
    %57 = arith.addf %54, %56 : vector<16x32xf32>
    %58 = math.tanh %57 : vector<16x32xf32>
    %cst_29 = arith.constant 1.000000e+00 : f32
    %59 = vector.broadcast %cst_29 : f32 to vector<16x32xf32>
    %60 = arith.subf %59, %53 : vector<16x32xf32>
    %61 = arith.mulf %60, %58 : vector<16x32xf32>
    %62 = arith.mulf %53, %43 : vector<16x32xf32>
    %63 = arith.addf %61, %62 : vector<16x32xf32>
    %64 = arith.truncf %63 : vector<16x32xf32> to vector<16x32xbf16>
    %cst_30 = arith.constant dense<0.000000e+00> : vector<16x32xf32>
    %65 = tpu.matmul %64, %2, %cst_30 {dimension_numbers = #tpu.dot_dimension_numbers<[1], [0], [0], [1], [0, 0, 1, 1], [], []>} : vector<16x32xbf16>, vector<32x32xbf16>, vector<16x32xf32> -> vector<16x32xf32>
    %66 = arith.addf %65, %17 : vector<16x32xf32>
    %cst_31 = arith.constant 0.000000e+00 : f32
    %67 = vector.broadcast %cst_31 : f32 to vector<16x32xf32>
    %68 = arith.maximumf %66, %67 : vector<16x32xf32>
    %69 = arith.truncf %68 : vector<16x32xf32> to vector<16x32xbf16>
    %cst_32 = arith.constant dense<0.000000e+00> : vector<16x32xf32>
    %70 = tpu.matmul %69, %3, %cst_32 {dimension_numbers = #tpu.dot_dimension_numbers<[1], [0], [0], [1], [0, 0, 1, 1], [], []>} : vector<16x32xbf16>, vector<32x32xbf16>, vector<16x32xf32> -> vector<16x32xf32>
    %71 = arith.addf %70, %20 : vector<16x32xf32>
    %cst_33 = arith.constant 0.000000e+00 : f32
    %72 = vector.broadcast %cst_33 : f32 to vector<16x32xf32>
    %73 = arith.maximumf %71, %72 : vector<16x32xf32>
    %74 = arith.truncf %73 : vector<16x32xf32> to vector<16x32xbf16>
    %cst_34 = arith.constant dense<0.000000e+00> : vector<16x32xf32>
    %75 = tpu.matmul %74, %4, %cst_34 {dimension_numbers = #tpu.dot_dimension_numbers<[1], [0], [0], [1], [0, 0, 1, 1], [], []>} : vector<16x32xbf16>, vector<32x32xbf16>, vector<16x32xf32> -> vector<16x32xf32>
    %76 = arith.addf %75, %23 : vector<16x32xf32>
    %77 = arith.addf %44, %76 : vector<16x32xf32>
    %c0_35 = arith.constant 0 : index
    %c0_36 = arith.constant 0 : index
    %c0_37 = arith.constant 0 : index
    %78 = vector.load %arg6[%c0_35, %c0_36, %c0_37] : memref<7x16x32xf32, #tpu.memory_space<vmem>>, vector<1x16x32xf32>
    %79 = vector.shape_cast %78 : vector<1x16x32xf32> to vector<16x32xf32>
    %80 = vector.shape_cast %77 : vector<16x32xf32> to vector<1x16x32xf32>
    tpu.vector_store %arg6[%c0_35, %c0_36, %c0_37], %80 {strides = array<i32>} : memref<7x16x32xf32, #tpu.memory_space<vmem>>, vector<1x16x32xf32>,
    %81 = arith.truncf %77 : vector<16x32xf32> to vector<16x32xbf16>
    %c0_38 = arith.constant 0 : index
    %c0_39 = arith.constant 0 : index
    %82 = vector.load %arg7[%c0_38, %c0_39] : memref<32x64xbf16, #tpu.memory_space<vmem>>, vector<16x32xbf16>
    tpu.vector_store %arg7[%c0_38, %c0_39], %81 {strides = array<i32>} : memref<32x64xbf16, #tpu.memory_space<vmem>>, vector<16x32xbf16>,
    %cst_40 = arith.constant dense<0.000000e+00> : vector<16x32xf32>
    %83 = tpu.matmul %81, %0, %cst_40 {dimension_numbers = #tpu.dot_dimension_numbers<[1], [0], [0], [1], [0, 0, 1, 1], [], []>} : vector<16x32xbf16>, vector<32x32xbf16>, vector<16x32xf32> -> vector<16x32xf32>
    %84 = arith.truncf %83 : vector<16x32xf32> to vector<16x32xbf16>
    %cst_41 = arith.constant dense<0.000000e+00> : vector<16x32xf32>
    %85 = tpu.matmul %7, %84, %cst_41 {dimension_numbers = #tpu.dot_dimension_numbers<[1], [0], [0], [1], [0, 0, 1, 1], [], []>} : vector<16x16xbf16>, vector<16x32xbf16>, vector<16x32xf32> -> vector<16x32xf32>
    %cst_42 = arith.constant 0.000000e+00 : f32
    %86 = vector.broadcast %cst_42 : f32 to vector<16x32xf32>
    %87 = arith.maximumf %85, %86 : vector<16x32xf32>
    %88 = arith.truncf %87 : vector<16x32xf32> to vector<16x32xbf16>
    %cst_43 = arith.constant dense<0.000000e+00> : vector<16x32xf32>
    %89 = tpu.matmul %88, %1, %cst_43 {dimension_numbers = #tpu.dot_dimension_numbers<[1], [0], [0], [1], [0, 0, 1, 1], [], []>} : vector<16x32xbf16>, vector<32x32xbf16>, vector<16x32xf32> -> vector<16x32xf32>
    %90 = arith.truncf %89 : vector<16x32xf32> to vector<16x32xbf16>
    %cst_44 = arith.constant dense<0.000000e+00> : vector<16x32xf32>
    %91 = tpu.matmul %7, %90, %cst_44 {dimension_numbers = #tpu.dot_dimension_numbers<[1], [0], [0], [1], [0, 0, 1, 1], [], []>} : vector<16x16xbf16>, vector<16x32xbf16>, vector<16x32xf32> -> vector<16x32xf32>
    %cst_45 = arith.constant 0.000000e+00 : f32
    %92 = vector.broadcast %cst_45 : f32 to vector<16x32xf32>
    %93 = arith.maximumf %91, %92 : vector<16x32xf32>
    %94 = arith.truncf %93 : vector<16x32xf32> to vector<16x32xbf16>
    %c0_46 = arith.constant 0 : index
    %c32_47 = arith.constant 32 : index
    %95 = vector.load %arg7[%c0_46, %c32_47] : memref<32x64xbf16, #tpu.memory_space<vmem>>, vector<16x32xbf16>
    tpu.vector_store %arg7[%c0_46, %c32_47], %94 {strides = array<i32>} : memref<32x64xbf16, #tpu.memory_space<vmem>>, vector<16x32xbf16>,
    %c0_48 = arith.constant 0 : index
    %c0_49 = arith.constant 0 : index
    %96 = vector.load %arg7[%c0_48, %c0_49] : memref<32x64xbf16, #tpu.memory_space<vmem>>, vector<16x64xbf16>
    %cst_50 = arith.constant dense<0.000000e+00> : vector<16x128xf32>
    %97 = tpu.matmul %96, %5, %cst_50 {dimension_numbers = #tpu.dot_dimension_numbers<[1], [0], [0], [1], [0, 0, 1, 1], [], []>} : vector<16x64xbf16>, vector<64x128xbf16>, vector<16x128xf32> -> vector<16x128xf32>
    %98 = arith.addf %97, %11 : vector<16x128xf32>
    %99 = vector.extract_strided_slice %98 {offsets = [0, 0], sizes = [16, 64], strides = [1, 1]} : vector<16x128xf32> to vector<16x64xf32>
    %100 = arith.negf %99 : vector<16x64xf32>
    %101 = math.exp %100 : vector<16x64xf32>
    %cst_51 = arith.constant 1.000000e+00 : f32
    %102 = vector.broadcast %cst_51 : f32 to vector<16x64xf32>
    %103 = arith.addf %102, %101 : vector<16x64xf32>
    %104 = arith.divf %102, %103 : vector<16x64xf32>
    %105 = vector.extract_strided_slice %104 {offsets = [0, 0], sizes = [16, 32], strides = [1, 1]} : vector<16x64xf32> to vector<16x32xf32>
    %106 = vector.extract_strided_slice %104 {offsets = [0, 32], sizes = [16, 32], strides = [1, 1]} : vector<16x64xf32> to vector<16x32xf32>
    %107 = vector.extract_strided_slice %98 {offsets = [0, 64], sizes = [16, 32], strides = [1, 1]} : vector<16x128xf32> to vector<16x32xf32>
    %108 = vector.extract_strided_slice %98 {offsets = [0, 96], sizes = [16, 32], strides = [1, 1]} : vector<16x128xf32> to vector<16x32xf32>
    %109 = arith.mulf %105, %108 : vector<16x32xf32>
    %110 = arith.addf %107, %109 : vector<16x32xf32>
    %111 = math.tanh %110 : vector<16x32xf32>
    %cst_52 = arith.constant 1.000000e+00 : f32
    %112 = vector.broadcast %cst_52 : f32 to vector<16x32xf32>
    %113 = arith.subf %112, %106 : vector<16x32xf32>
    %114 = arith.mulf %113, %111 : vector<16x32xf32>
    %115 = arith.mulf %106, %63 : vector<16x32xf32>
    %116 = arith.addf %114, %115 : vector<16x32xf32>
    %117 = arith.truncf %116 : vector<16x32xf32> to vector<16x32xbf16>
    %cst_53 = arith.constant dense<0.000000e+00> : vector<16x32xf32>
    %118 = tpu.matmul %117, %2, %cst_53 {dimension_numbers = #tpu.dot_dimension_numbers<[1], [0], [0], [1], [0, 0, 1, 1], [], []>} : vector<16x32xbf16>, vector<32x32xbf16>, vector<16x32xf32> -> vector<16x32xf32>
    %119 = arith.addf %118, %17 : vector<16x32xf32>
    %cst_54 = arith.constant 0.000000e+00 : f32
    %120 = vector.broadcast %cst_54 : f32 to vector<16x32xf32>
    %121 = arith.maximumf %119, %120 : vector<16x32xf32>
    %122 = arith.truncf %121 : vector<16x32xf32> to vector<16x32xbf16>
    %cst_55 = arith.constant dense<0.000000e+00> : vector<16x32xf32>
    %123 = tpu.matmul %122, %3, %cst_55 {dimension_numbers = #tpu.dot_dimension_numbers<[1], [0], [0], [1], [0, 0, 1, 1], [], []>} : vector<16x32xbf16>, vector<32x32xbf16>, vector<16x32xf32> -> vector<16x32xf32>
    %124 = arith.addf %123, %20 : vector<16x32xf32>
    %cst_56 = arith.constant 0.000000e+00 : f32
    %125 = vector.broadcast %cst_56 : f32 to vector<16x32xf32>
    %126 = arith.maximumf %124, %125 : vector<16x32xf32>
    %127 = arith.truncf %126 : vector<16x32xf32> to vector<16x32xbf16>
    %cst_57 = arith.constant dense<0.000000e+00> : vector<16x32xf32>
    %128 = tpu.matmul %127, %4, %cst_57 {dimension_numbers = #tpu.dot_dimension_numbers<[1], [0], [0], [1], [0, 0, 1, 1], [], []>} : vector<16x32xbf16>, vector<32x32xbf16>, vector<16x32xf32> -> vector<16x32xf32>
    %129 = arith.addf %128, %23 : vector<16x32xf32>
    %130 = arith.addf %77, %129 : vector<16x32xf32>
    %c1 = arith.constant 1 : index
    %c0_58 = arith.constant 0 : index
    %c0_59 = arith.constant 0 : index
    %131 = vector.load %arg6[%c1, %c0_58, %c0_59] : memref<7x16x32xf32, #tpu.memory_space<vmem>>, vector<1x16x32xf32>
    %132 = vector.shape_cast %131 : vector<1x16x32xf32> to vector<16x32xf32>
    %133 = vector.shape_cast %130 : vector<16x32xf32> to vector<1x16x32xf32>
    tpu.vector_store %arg6[%c1, %c0_58, %c0_59], %133 {strides = array<i32>} : memref<7x16x32xf32, #tpu.memory_space<vmem>>, vector<1x16x32xf32>,
    %134 = arith.truncf %130 : vector<16x32xf32> to vector<16x32xbf16>
    %c0_60 = arith.constant 0 : index
    %c0_61 = arith.constant 0 : index
    %135 = vector.load %arg7[%c0_60, %c0_61] : memref<32x64xbf16, #tpu.memory_space<vmem>>, vector<16x32xbf16>
    tpu.vector_store %arg7[%c0_60, %c0_61], %134 {strides = array<i32>} : memref<32x64xbf16, #tpu.memory_space<vmem>>, vector<16x32xbf16>,
    %cst_62 = arith.constant dense<0.000000e+00> : vector<16x32xf32>
    %136 = tpu.matmul %134, %0, %cst_62 {dimension_numbers = #tpu.dot_dimension_numbers<[1], [0], [0], [1], [0, 0, 1, 1], [], []>} : vector<16x32xbf16>, vector<32x32xbf16>, vector<16x32xf32> -> vector<16x32xf32>
    %137 = arith.truncf %136 : vector<16x32xf32> to vector<16x32xbf16>
    %cst_63 = arith.constant dense<0.000000e+00> : vector<16x32xf32>
    %138 = tpu.matmul %7, %137, %cst_63 {dimension_numbers = #tpu.dot_dimension_numbers<[1], [0], [0], [1], [0, 0, 1, 1], [], []>} : vector<16x16xbf16>, vector<16x32xbf16>, vector<16x32xf32> -> vector<16x32xf32>
    %cst_64 = arith.constant 0.000000e+00 : f32
    %139 = vector.broadcast %cst_64 : f32 to vector<16x32xf32>
    %140 = arith.maximumf %138, %139 : vector<16x32xf32>
    %141 = arith.truncf %140 : vector<16x32xf32> to vector<16x32xbf16>
    %cst_65 = arith.constant dense<0.000000e+00> : vector<16x32xf32>
    %142 = tpu.matmul %141, %1, %cst_65 {dimension_numbers = #tpu.dot_dimension_numbers<[1], [0], [0], [1], [0, 0, 1, 1], [], []>} : vector<16x32xbf16>, vector<32x32xbf16>, vector<16x32xf32> -> vector<16x32xf32>
    %143 = arith.truncf %142 : vector<16x32xf32> to vector<16x32xbf16>
    %cst_66 = arith.constant dense<0.000000e+00> : vector<16x32xf32>
    %144 = tpu.matmul %7, %143, %cst_66 {dimension_numbers = #tpu.dot_dimension_numbers<[1], [0], [0], [1], [0, 0, 1, 1], [], []>} : vector<16x16xbf16>, vector<16x32xbf16>, vector<16x32xf32> -> vector<16x32xf32>
    %cst_67 = arith.constant 0.000000e+00 : f32
    %145 = vector.broadcast %cst_67 : f32 to vector<16x32xf32>
    %146 = arith.maximumf %144, %145 : vector<16x32xf32>
    %147 = arith.truncf %146 : vector<16x32xf32> to vector<16x32xbf16>
    %c0_68 = arith.constant 0 : index
    %c32_69 = arith.constant 32 : index
    %148 = vector.load %arg7[%c0_68, %c32_69] : memref<32x64xbf16, #tpu.memory_space<vmem>>, vector<16x32xbf16>
    tpu.vector_store %arg7[%c0_68, %c32_69], %147 {strides = array<i32>} : memref<32x64xbf16, #tpu.memory_space<vmem>>, vector<16x32xbf16>,
    %c0_70 = arith.constant 0 : index
    %c0_71 = arith.constant 0 : index
    %149 = vector.load %arg7[%c0_70, %c0_71] : memref<32x64xbf16, #tpu.memory_space<vmem>>, vector<16x64xbf16>
    %cst_72 = arith.constant dense<0.000000e+00> : vector<16x128xf32>
    %150 = tpu.matmul %149, %5, %cst_72 {dimension_numbers = #tpu.dot_dimension_numbers<[1], [0], [0], [1], [0, 0, 1, 1], [], []>} : vector<16x64xbf16>, vector<64x128xbf16>, vector<16x128xf32> -> vector<16x128xf32>
    %151 = arith.addf %150, %11 : vector<16x128xf32>
    %152 = vector.extract_strided_slice %151 {offsets = [0, 0], sizes = [16, 64], strides = [1, 1]} : vector<16x128xf32> to vector<16x64xf32>
    %153 = arith.negf %152 : vector<16x64xf32>
    %154 = math.exp %153 : vector<16x64xf32>
    %cst_73 = arith.constant 1.000000e+00 : f32
    %155 = vector.broadcast %cst_73 : f32 to vector<16x64xf32>
    %156 = arith.addf %155, %154 : vector<16x64xf32>
    %157 = arith.divf %155, %156 : vector<16x64xf32>
    %158 = vector.extract_strided_slice %157 {offsets = [0, 0], sizes = [16, 32], strides = [1, 1]} : vector<16x64xf32> to vector<16x32xf32>
    %159 = vector.extract_strided_slice %157 {offsets = [0, 32], sizes = [16, 32], strides = [1, 1]} : vector<16x64xf32> to vector<16x32xf32>
    %160 = vector.extract_strided_slice %151 {offsets = [0, 64], sizes = [16, 32], strides = [1, 1]} : vector<16x128xf32> to vector<16x32xf32>
    %161 = vector.extract_strided_slice %151 {offsets = [0, 96], sizes = [16, 32], strides = [1, 1]} : vector<16x128xf32> to vector<16x32xf32>
    %162 = arith.mulf %158, %161 : vector<16x32xf32>
    %163 = arith.addf %160, %162 : vector<16x32xf32>
    %164 = math.tanh %163 : vector<16x32xf32>
    %cst_74 = arith.constant 1.000000e+00 : f32
    %165 = vector.broadcast %cst_74 : f32 to vector<16x32xf32>
    %166 = arith.subf %165, %159 : vector<16x32xf32>
    %167 = arith.mulf %166, %164 : vector<16x32xf32>
    %168 = arith.mulf %159, %116 : vector<16x32xf32>
    %169 = arith.addf %167, %168 : vector<16x32xf32>
    %170 = arith.truncf %169 : vector<16x32xf32> to vector<16x32xbf16>
    %cst_75 = arith.constant dense<0.000000e+00> : vector<16x32xf32>
    %171 = tpu.matmul %170, %2, %cst_75 {dimension_numbers = #tpu.dot_dimension_numbers<[1], [0], [0], [1], [0, 0, 1, 1], [], []>} : vector<16x32xbf16>, vector<32x32xbf16>, vector<16x32xf32> -> vector<16x32xf32>
    %172 = arith.addf %171, %17 : vector<16x32xf32>
    %cst_76 = arith.constant 0.000000e+00 : f32
    %173 = vector.broadcast %cst_76 : f32 to vector<16x32xf32>
    %174 = arith.maximumf %172, %173 : vector<16x32xf32>
    %175 = arith.truncf %174 : vector<16x32xf32> to vector<16x32xbf16>
    %cst_77 = arith.constant dense<0.000000e+00> : vector<16x32xf32>
    %176 = tpu.matmul %175, %3, %cst_77 {dimension_numbers = #tpu.dot_dimension_numbers<[1], [0], [0], [1], [0, 0, 1, 1], [], []>} : vector<16x32xbf16>, vector<32x32xbf16>, vector<16x32xf32> -> vector<16x32xf32>
    %177 = arith.addf %176, %20 : vector<16x32xf32>
    %cst_78 = arith.constant 0.000000e+00 : f32
    %178 = vector.broadcast %cst_78 : f32 to vector<16x32xf32>
    %179 = arith.maximumf %177, %178 : vector<16x32xf32>
    %180 = arith.truncf %179 : vector<16x32xf32> to vector<16x32xbf16>
    %cst_79 = arith.constant dense<0.000000e+00> : vector<16x32xf32>
    %181 = tpu.matmul %180, %4, %cst_79 {dimension_numbers = #tpu.dot_dimension_numbers<[1], [0], [0], [1], [0, 0, 1, 1], [], []>} : vector<16x32xbf16>, vector<32x32xbf16>, vector<16x32xf32> -> vector<16x32xf32>
    %182 = arith.addf %181, %23 : vector<16x32xf32>
    %183 = arith.addf %130, %182 : vector<16x32xf32>
    %c2 = arith.constant 2 : index
    %c0_80 = arith.constant 0 : index
    %c0_81 = arith.constant 0 : index
    %184 = vector.load %arg6[%c2, %c0_80, %c0_81] : memref<7x16x32xf32, #tpu.memory_space<vmem>>, vector<1x16x32xf32>
    %185 = vector.shape_cast %184 : vector<1x16x32xf32> to vector<16x32xf32>
    %186 = vector.shape_cast %183 : vector<16x32xf32> to vector<1x16x32xf32>
    tpu.vector_store %arg6[%c2, %c0_80, %c0_81], %186 {strides = array<i32>} : memref<7x16x32xf32, #tpu.memory_space<vmem>>, vector<1x16x32xf32>,
    %187 = arith.truncf %183 : vector<16x32xf32> to vector<16x32xbf16>
    %c0_82 = arith.constant 0 : index
    %c0_83 = arith.constant 0 : index
    %188 = vector.load %arg7[%c0_82, %c0_83] : memref<32x64xbf16, #tpu.memory_space<vmem>>, vector<16x32xbf16>
    tpu.vector_store %arg7[%c0_82, %c0_83], %187 {strides = array<i32>} : memref<32x64xbf16, #tpu.memory_space<vmem>>, vector<16x32xbf16>,
    %cst_84 = arith.constant dense<0.000000e+00> : vector<16x32xf32>
    %189 = tpu.matmul %187, %0, %cst_84 {dimension_numbers = #tpu.dot_dimension_numbers<[1], [0], [0], [1], [0, 0, 1, 1], [], []>} : vector<16x32xbf16>, vector<32x32xbf16>, vector<16x32xf32> -> vector<16x32xf32>
    %190 = arith.truncf %189 : vector<16x32xf32> to vector<16x32xbf16>
    %cst_85 = arith.constant dense<0.000000e+00> : vector<16x32xf32>
    %191 = tpu.matmul %7, %190, %cst_85 {dimension_numbers = #tpu.dot_dimension_numbers<[1], [0], [0], [1], [0, 0, 1, 1], [], []>} : vector<16x16xbf16>, vector<16x32xbf16>, vector<16x32xf32> -> vector<16x32xf32>
    %cst_86 = arith.constant 0.000000e+00 : f32
    %192 = vector.broadcast %cst_86 : f32 to vector<16x32xf32>
    %193 = arith.maximumf %191, %192 : vector<16x32xf32>
    %194 = arith.truncf %193 : vector<16x32xf32> to vector<16x32xbf16>
    %cst_87 = arith.constant dense<0.000000e+00> : vector<16x32xf32>
    %195 = tpu.matmul %194, %1, %cst_87 {dimension_numbers = #tpu.dot_dimension_numbers<[1], [0], [0], [1], [0, 0, 1, 1], [], []>} : vector<16x32xbf16>, vector<32x32xbf16>, vector<16x32xf32> -> vector<16x32xf32>
    %196 = arith.truncf %195 : vector<16x32xf32> to vector<16x32xbf16>
    %cst_88 = arith.constant dense<0.000000e+00> : vector<16x32xf32>
    %197 = tpu.matmul %7, %196, %cst_88 {dimension_numbers = #tpu.dot_dimension_numbers<[1], [0], [0], [1], [0, 0, 1, 1], [], []>} : vector<16x16xbf16>, vector<16x32xbf16>, vector<16x32xf32> -> vector<16x32xf32>
    %cst_89 = arith.constant 0.000000e+00 : f32
    %198 = vector.broadcast %cst_89 : f32 to vector<16x32xf32>
    %199 = arith.maximumf %197, %198 : vector<16x32xf32>
    %200 = arith.truncf %199 : vector<16x32xf32> to vector<16x32xbf16>
    %c0_90 = arith.constant 0 : index
    %c32_91 = arith.constant 32 : index
    %201 = vector.load %arg7[%c0_90, %c32_91] : memref<32x64xbf16, #tpu.memory_space<vmem>>, vector<16x32xbf16>
    tpu.vector_store %arg7[%c0_90, %c32_91], %200 {strides = array<i32>} : memref<32x64xbf16, #tpu.memory_space<vmem>>, vector<16x32xbf16>,
    %c0_92 = arith.constant 0 : index
    %c0_93 = arith.constant 0 : index
    %202 = vector.load %arg7[%c0_92, %c0_93] : memref<32x64xbf16, #tpu.memory_space<vmem>>, vector<16x64xbf16>
    %cst_94 = arith.constant dense<0.000000e+00> : vector<16x128xf32>
    %203 = tpu.matmul %202, %5, %cst_94 {dimension_numbers = #tpu.dot_dimension_numbers<[1], [0], [0], [1], [0, 0, 1, 1], [], []>} : vector<16x64xbf16>, vector<64x128xbf16>, vector<16x128xf32> -> vector<16x128xf32>
    %204 = arith.addf %203, %11 : vector<16x128xf32>
    %205 = vector.extract_strided_slice %204 {offsets = [0, 0], sizes = [16, 64], strides = [1, 1]} : vector<16x128xf32> to vector<16x64xf32>
    %206 = arith.negf %205 : vector<16x64xf32>
    %207 = math.exp %206 : vector<16x64xf32>
    %cst_95 = arith.constant 1.000000e+00 : f32
    %208 = vector.broadcast %cst_95 : f32 to vector<16x64xf32>
    %209 = arith.addf %208, %207 : vector<16x64xf32>
    %210 = arith.divf %208, %209 : vector<16x64xf32>
    %211 = vector.extract_strided_slice %210 {offsets = [0, 0], sizes = [16, 32], strides = [1, 1]} : vector<16x64xf32> to vector<16x32xf32>
    %212 = vector.extract_strided_slice %210 {offsets = [0, 32], sizes = [16, 32], strides = [1, 1]} : vector<16x64xf32> to vector<16x32xf32>
    %213 = vector.extract_strided_slice %204 {offsets = [0, 64], sizes = [16, 32], strides = [1, 1]} : vector<16x128xf32> to vector<16x32xf32>
    %214 = vector.extract_strided_slice %204 {offsets = [0, 96], sizes = [16, 32], strides = [1, 1]} : vector<16x128xf32> to vector<16x32xf32>
    %215 = arith.mulf %211, %214 : vector<16x32xf32>
    %216 = arith.addf %213, %215 : vector<16x32xf32>
    %217 = math.tanh %216 : vector<16x32xf32>
    %cst_96 = arith.constant 1.000000e+00 : f32
    %218 = vector.broadcast %cst_96 : f32 to vector<16x32xf32>
    %219 = arith.subf %218, %212 : vector<16x32xf32>
    %220 = arith.mulf %219, %217 : vector<16x32xf32>
    %221 = arith.mulf %212, %169 : vector<16x32xf32>
    %222 = arith.addf %220, %221 : vector<16x32xf32>
    %223 = arith.truncf %222 : vector<16x32xf32> to vector<16x32xbf16>
    %cst_97 = arith.constant dense<0.000000e+00> : vector<16x32xf32>
    %224 = tpu.matmul %223, %2, %cst_97 {dimension_numbers = #tpu.dot_dimension_numbers<[1], [0], [0], [1], [0, 0, 1, 1], [], []>} : vector<16x32xbf16>, vector<32x32xbf16>, vector<16x32xf32> -> vector<16x32xf32>
    %225 = arith.addf %224, %17 : vector<16x32xf32>
    %cst_98 = arith.constant 0.000000e+00 : f32
    %226 = vector.broadcast %cst_98 : f32 to vector<16x32xf32>
    %227 = arith.maximumf %225, %226 : vector<16x32xf32>
    %228 = arith.truncf %227 : vector<16x32xf32> to vector<16x32xbf16>
    %cst_99 = arith.constant dense<0.000000e+00> : vector<16x32xf32>
    %229 = tpu.matmul %228, %3, %cst_99 {dimension_numbers = #tpu.dot_dimension_numbers<[1], [0], [0], [1], [0, 0, 1, 1], [], []>} : vector<16x32xbf16>, vector<32x32xbf16>, vector<16x32xf32> -> vector<16x32xf32>
    %230 = arith.addf %229, %20 : vector<16x32xf32>
    %cst_100 = arith.constant 0.000000e+00 : f32
    %231 = vector.broadcast %cst_100 : f32 to vector<16x32xf32>
    %232 = arith.maximumf %230, %231 : vector<16x32xf32>
    %233 = arith.truncf %232 : vector<16x32xf32> to vector<16x32xbf16>
    %cst_101 = arith.constant dense<0.000000e+00> : vector<16x32xf32>
    %234 = tpu.matmul %233, %4, %cst_101 {dimension_numbers = #tpu.dot_dimension_numbers<[1], [0], [0], [1], [0, 0, 1, 1], [], []>} : vector<16x32xbf16>, vector<32x32xbf16>, vector<16x32xf32> -> vector<16x32xf32>
    %235 = arith.addf %234, %23 : vector<16x32xf32>
    %236 = arith.addf %183, %235 : vector<16x32xf32>
    %c3 = arith.constant 3 : index
    %c0_102 = arith.constant 0 : index
    %c0_103 = arith.constant 0 : index
    %237 = vector.load %arg6[%c3, %c0_102, %c0_103] : memref<7x16x32xf32, #tpu.memory_space<vmem>>, vector<1x16x32xf32>
    %238 = vector.shape_cast %237 : vector<1x16x32xf32> to vector<16x32xf32>
    %239 = vector.shape_cast %236 : vector<16x32xf32> to vector<1x16x32xf32>
    tpu.vector_store %arg6[%c3, %c0_102, %c0_103], %239 {strides = array<i32>} : memref<7x16x32xf32, #tpu.memory_space<vmem>>, vector<1x16x32xf32>,
    %240 = vector.extract_strided_slice %24 {offsets = [16, 0], sizes = [16, 32], strides = [1, 1]} : vector<32x32xf32> to vector<16x32xf32>
    %241 = vector.extract_strided_slice %42 {offsets = [16, 0], sizes = [16, 128], strides = [1, 1]} : vector<32x128xf32> to vector<16x128xf32>
    %242 = vector.extract_strided_slice %241 {offsets = [0, 0], sizes = [16, 64], strides = [1, 1]} : vector<16x128xf32> to vector<16x64xf32>
    %243 = arith.negf %242 : vector<16x64xf32>
    %244 = math.exp %243 : vector<16x64xf32>
    %cst_104 = arith.constant 1.000000e+00 : f32
    %245 = vector.broadcast %cst_104 : f32 to vector<16x64xf32>
    %246 = arith.addf %245, %244 : vector<16x64xf32>
    %247 = arith.divf %245, %246 : vector<16x64xf32>
    %248 = vector.extract_strided_slice %247 {offsets = [0, 0], sizes = [16, 32], strides = [1, 1]} : vector<16x64xf32> to vector<16x32xf32>
    %249 = vector.extract_strided_slice %247 {offsets = [0, 32], sizes = [16, 32], strides = [1, 1]} : vector<16x64xf32> to vector<16x32xf32>
    %250 = vector.extract_strided_slice %241 {offsets = [0, 64], sizes = [16, 32], strides = [1, 1]} : vector<16x128xf32> to vector<16x32xf32>
    %251 = vector.extract_strided_slice %241 {offsets = [0, 96], sizes = [16, 32], strides = [1, 1]} : vector<16x128xf32> to vector<16x32xf32>
    %252 = arith.mulf %248, %251 : vector<16x32xf32>
    %253 = arith.addf %250, %252 : vector<16x32xf32>
    %254 = math.tanh %253 : vector<16x32xf32>
    %cst_105 = arith.constant 1.000000e+00 : f32
    %255 = vector.broadcast %cst_105 : f32 to vector<16x32xf32>
    %256 = arith.subf %255, %249 : vector<16x32xf32>
    %257 = arith.mulf %256, %254 : vector<16x32xf32>
    %258 = arith.mulf %249, %222 : vector<16x32xf32>
    %259 = arith.addf %257, %258 : vector<16x32xf32>
    %260 = arith.truncf %259 : vector<16x32xf32> to vector<16x32xbf16>
    %cst_106 = arith.constant dense<0.000000e+00> : vector<16x32xf32>
    %261 = tpu.matmul %260, %2, %cst_106 {dimension_numbers = #tpu.dot_dimension_numbers<[1], [0], [0], [1], [0, 0, 1, 1], [], []>} : vector<16x32xbf16>, vector<32x32xbf16>, vector<16x32xf32> -> vector<16x32xf32>
    %262 = arith.addf %261, %17 : vector<16x32xf32>
    %cst_107 = arith.constant 0.000000e+00 : f32
    %263 = vector.broadcast %cst_107 : f32 to vector<16x32xf32>
    %264 = arith.maximumf %262, %263 : vector<16x32xf32>
    %265 = arith.truncf %264 : vector<16x32xf32> to vector<16x32xbf16>
    %cst_108 = arith.constant dense<0.000000e+00> : vector<16x32xf32>
    %266 = tpu.matmul %265, %3, %cst_108 {dimension_numbers = #tpu.dot_dimension_numbers<[1], [0], [0], [1], [0, 0, 1, 1], [], []>} : vector<16x32xbf16>, vector<32x32xbf16>, vector<16x32xf32> -> vector<16x32xf32>
    %267 = arith.addf %266, %20 : vector<16x32xf32>
    %cst_109 = arith.constant 0.000000e+00 : f32
    %268 = vector.broadcast %cst_109 : f32 to vector<16x32xf32>
    %269 = arith.maximumf %267, %268 : vector<16x32xf32>
    %270 = arith.truncf %269 : vector<16x32xf32> to vector<16x32xbf16>
    %cst_110 = arith.constant dense<0.000000e+00> : vector<16x32xf32>
    %271 = tpu.matmul %270, %4, %cst_110 {dimension_numbers = #tpu.dot_dimension_numbers<[1], [0], [0], [1], [0, 0, 1, 1], [], []>} : vector<16x32xbf16>, vector<32x32xbf16>, vector<16x32xf32> -> vector<16x32xf32>
    %272 = arith.addf %271, %23 : vector<16x32xf32>
    %273 = arith.addf %240, %272 : vector<16x32xf32>
    %c4 = arith.constant 4 : index
    %c0_111 = arith.constant 0 : index
    %c0_112 = arith.constant 0 : index
    %274 = vector.load %arg6[%c4, %c0_111, %c0_112] : memref<7x16x32xf32, #tpu.memory_space<vmem>>, vector<1x16x32xf32>
    %275 = vector.shape_cast %274 : vector<1x16x32xf32> to vector<16x32xf32>
    %276 = vector.shape_cast %273 : vector<16x32xf32> to vector<1x16x32xf32>
    tpu.vector_store %arg6[%c4, %c0_111, %c0_112], %276 {strides = array<i32>} : memref<7x16x32xf32, #tpu.memory_space<vmem>>, vector<1x16x32xf32>,
    %277 = arith.truncf %273 : vector<16x32xf32> to vector<16x32xbf16>
    %c0_113 = arith.constant 0 : index
    %c0_114 = arith.constant 0 : index
    %278 = vector.load %arg7[%c0_113, %c0_114] : memref<32x64xbf16, #tpu.memory_space<vmem>>, vector<16x32xbf16>
    tpu.vector_store %arg7[%c0_113, %c0_114], %277 {strides = array<i32>} : memref<32x64xbf16, #tpu.memory_space<vmem>>, vector<16x32xbf16>,
    %cst_115 = arith.constant dense<0.000000e+00> : vector<16x32xf32>
    %279 = tpu.matmul %277, %0, %cst_115 {dimension_numbers = #tpu.dot_dimension_numbers<[1], [0], [0], [1], [0, 0, 1, 1], [], []>} : vector<16x32xbf16>, vector<32x32xbf16>, vector<16x32xf32> -> vector<16x32xf32>
    %280 = arith.truncf %279 : vector<16x32xf32> to vector<16x32xbf16>
    %cst_116 = arith.constant dense<0.000000e+00> : vector<16x32xf32>
    %281 = tpu.matmul %7, %280, %cst_116 {dimension_numbers = #tpu.dot_dimension_numbers<[1], [0], [0], [1], [0, 0, 1, 1], [], []>} : vector<16x16xbf16>, vector<16x32xbf16>, vector<16x32xf32> -> vector<16x32xf32>
    %cst_117 = arith.constant 0.000000e+00 : f32
    %282 = vector.broadcast %cst_117 : f32 to vector<16x32xf32>
    %283 = arith.maximumf %281, %282 : vector<16x32xf32>
    %284 = arith.truncf %283 : vector<16x32xf32> to vector<16x32xbf16>
    %cst_118 = arith.constant dense<0.000000e+00> : vector<16x32xf32>
    %285 = tpu.matmul %284, %1, %cst_118 {dimension_numbers = #tpu.dot_dimension_numbers<[1], [0], [0], [1], [0, 0, 1, 1], [], []>} : vector<16x32xbf16>, vector<32x32xbf16>, vector<16x32xf32> -> vector<16x32xf32>
    %286 = arith.truncf %285 : vector<16x32xf32> to vector<16x32xbf16>
    %cst_119 = arith.constant dense<0.000000e+00> : vector<16x32xf32>
    %287 = tpu.matmul %7, %286, %cst_119 {dimension_numbers = #tpu.dot_dimension_numbers<[1], [0], [0], [1], [0, 0, 1, 1], [], []>} : vector<16x16xbf16>, vector<16x32xbf16>, vector<16x32xf32> -> vector<16x32xf32>
    %cst_120 = arith.constant 0.000000e+00 : f32
    %288 = vector.broadcast %cst_120 : f32 to vector<16x32xf32>
    %289 = arith.maximumf %287, %288 : vector<16x32xf32>
    %290 = arith.truncf %289 : vector<16x32xf32> to vector<16x32xbf16>
    %c0_121 = arith.constant 0 : index
    %c32_122 = arith.constant 32 : index
    %291 = vector.load %arg7[%c0_121, %c32_122] : memref<32x64xbf16, #tpu.memory_space<vmem>>, vector<16x32xbf16>
    tpu.vector_store %arg7[%c0_121, %c32_122], %290 {strides = array<i32>} : memref<32x64xbf16, #tpu.memory_space<vmem>>, vector<16x32xbf16>,
    %c0_123 = arith.constant 0 : index
    %c0_124 = arith.constant 0 : index
    %292 = vector.load %arg7[%c0_123, %c0_124] : memref<32x64xbf16, #tpu.memory_space<vmem>>, vector<16x64xbf16>
    %cst_125 = arith.constant dense<0.000000e+00> : vector<16x128xf32>
    %293 = tpu.matmul %292, %5, %cst_125 {dimension_numbers = #tpu.dot_dimension_numbers<[1], [0], [0], [1], [0, 0, 1, 1], [], []>} : vector<16x64xbf16>, vector<64x128xbf16>, vector<16x128xf32> -> vector<16x128xf32>
    %294 = arith.addf %293, %11 : vector<16x128xf32>
    %295 = vector.extract_strided_slice %294 {offsets = [0, 0], sizes = [16, 64], strides = [1, 1]} : vector<16x128xf32> to vector<16x64xf32>
    %296 = arith.negf %295 : vector<16x64xf32>
    %297 = math.exp %296 : vector<16x64xf32>
    %cst_126 = arith.constant 1.000000e+00 : f32
    %298 = vector.broadcast %cst_126 : f32 to vector<16x64xf32>
    %299 = arith.addf %298, %297 : vector<16x64xf32>
    %300 = arith.divf %298, %299 : vector<16x64xf32>
    %301 = vector.extract_strided_slice %300 {offsets = [0, 0], sizes = [16, 32], strides = [1, 1]} : vector<16x64xf32> to vector<16x32xf32>
    %302 = vector.extract_strided_slice %300 {offsets = [0, 32], sizes = [16, 32], strides = [1, 1]} : vector<16x64xf32> to vector<16x32xf32>
    %303 = vector.extract_strided_slice %294 {offsets = [0, 64], sizes = [16, 32], strides = [1, 1]} : vector<16x128xf32> to vector<16x32xf32>
    %304 = vector.extract_strided_slice %294 {offsets = [0, 96], sizes = [16, 32], strides = [1, 1]} : vector<16x128xf32> to vector<16x32xf32>
    %305 = arith.mulf %301, %304 : vector<16x32xf32>
    %306 = arith.addf %303, %305 : vector<16x32xf32>
    %307 = math.tanh %306 : vector<16x32xf32>
    %cst_127 = arith.constant 1.000000e+00 : f32
    %308 = vector.broadcast %cst_127 : f32 to vector<16x32xf32>
    %309 = arith.subf %308, %302 : vector<16x32xf32>
    %310 = arith.mulf %309, %307 : vector<16x32xf32>
    %311 = arith.mulf %302, %259 : vector<16x32xf32>
    %312 = arith.addf %310, %311 : vector<16x32xf32>
    %313 = arith.truncf %312 : vector<16x32xf32> to vector<16x32xbf16>
    %cst_128 = arith.constant dense<0.000000e+00> : vector<16x32xf32>
    %314 = tpu.matmul %313, %2, %cst_128 {dimension_numbers = #tpu.dot_dimension_numbers<[1], [0], [0], [1], [0, 0, 1, 1], [], []>} : vector<16x32xbf16>, vector<32x32xbf16>, vector<16x32xf32> -> vector<16x32xf32>
    %315 = arith.addf %314, %17 : vector<16x32xf32>
    %cst_129 = arith.constant 0.000000e+00 : f32
    %316 = vector.broadcast %cst_129 : f32 to vector<16x32xf32>
    %317 = arith.maximumf %315, %316 : vector<16x32xf32>
    %318 = arith.truncf %317 : vector<16x32xf32> to vector<16x32xbf16>
    %cst_130 = arith.constant dense<0.000000e+00> : vector<16x32xf32>
    %319 = tpu.matmul %318, %3, %cst_130 {dimension_numbers = #tpu.dot_dimension_numbers<[1], [0], [0], [1], [0, 0, 1, 1], [], []>} : vector<16x32xbf16>, vector<32x32xbf16>, vector<16x32xf32> -> vector<16x32xf32>
    %320 = arith.addf %319, %20 : vector<16x32xf32>
    %cst_131 = arith.constant 0.000000e+00 : f32
    %321 = vector.broadcast %cst_131 : f32 to vector<16x32xf32>
    %322 = arith.maximumf %320, %321 : vector<16x32xf32>
    %323 = arith.truncf %322 : vector<16x32xf32> to vector<16x32xbf16>
    %cst_132 = arith.constant dense<0.000000e+00> : vector<16x32xf32>
    %324 = tpu.matmul %323, %4, %cst_132 {dimension_numbers = #tpu.dot_dimension_numbers<[1], [0], [0], [1], [0, 0, 1, 1], [], []>} : vector<16x32xbf16>, vector<32x32xbf16>, vector<16x32xf32> -> vector<16x32xf32>
    %325 = arith.addf %324, %23 : vector<16x32xf32>
    %326 = arith.addf %273, %325 : vector<16x32xf32>
    %c5 = arith.constant 5 : index
    %c0_133 = arith.constant 0 : index
    %c0_134 = arith.constant 0 : index
    %327 = vector.load %arg6[%c5, %c0_133, %c0_134] : memref<7x16x32xf32, #tpu.memory_space<vmem>>, vector<1x16x32xf32>
    %328 = vector.shape_cast %327 : vector<1x16x32xf32> to vector<16x32xf32>
    %329 = vector.shape_cast %326 : vector<16x32xf32> to vector<1x16x32xf32>
    tpu.vector_store %arg6[%c5, %c0_133, %c0_134], %329 {strides = array<i32>} : memref<7x16x32xf32, #tpu.memory_space<vmem>>, vector<1x16x32xf32>,
    %330 = arith.truncf %326 : vector<16x32xf32> to vector<16x32xbf16>
    %c0_135 = arith.constant 0 : index
    %c0_136 = arith.constant 0 : index
    %331 = vector.load %arg7[%c0_135, %c0_136] : memref<32x64xbf16, #tpu.memory_space<vmem>>, vector<16x32xbf16>
    tpu.vector_store %arg7[%c0_135, %c0_136], %330 {strides = array<i32>} : memref<32x64xbf16, #tpu.memory_space<vmem>>, vector<16x32xbf16>,
    %cst_137 = arith.constant dense<0.000000e+00> : vector<16x32xf32>
    %332 = tpu.matmul %330, %0, %cst_137 {dimension_numbers = #tpu.dot_dimension_numbers<[1], [0], [0], [1], [0, 0, 1, 1], [], []>} : vector<16x32xbf16>, vector<32x32xbf16>, vector<16x32xf32> -> vector<16x32xf32>
    %333 = arith.truncf %332 : vector<16x32xf32> to vector<16x32xbf16>
    %cst_138 = arith.constant dense<0.000000e+00> : vector<16x32xf32>
    %334 = tpu.matmul %7, %333, %cst_138 {dimension_numbers = #tpu.dot_dimension_numbers<[1], [0], [0], [1], [0, 0, 1, 1], [], []>} : vector<16x16xbf16>, vector<16x32xbf16>, vector<16x32xf32> -> vector<16x32xf32>
    %cst_139 = arith.constant 0.000000e+00 : f32
    %335 = vector.broadcast %cst_139 : f32 to vector<16x32xf32>
    %336 = arith.maximumf %334, %335 : vector<16x32xf32>
    %337 = arith.truncf %336 : vector<16x32xf32> to vector<16x32xbf16>
    %cst_140 = arith.constant dense<0.000000e+00> : vector<16x32xf32>
    %338 = tpu.matmul %337, %1, %cst_140 {dimension_numbers = #tpu.dot_dimension_numbers<[1], [0], [0], [1], [0, 0, 1, 1], [], []>} : vector<16x32xbf16>, vector<32x32xbf16>, vector<16x32xf32> -> vector<16x32xf32>
    %339 = arith.truncf %338 : vector<16x32xf32> to vector<16x32xbf16>
    %cst_141 = arith.constant dense<0.000000e+00> : vector<16x32xf32>
    %340 = tpu.matmul %7, %339, %cst_141 {dimension_numbers = #tpu.dot_dimension_numbers<[1], [0], [0], [1], [0, 0, 1, 1], [], []>} : vector<16x16xbf16>, vector<16x32xbf16>, vector<16x32xf32> -> vector<16x32xf32>
    %cst_142 = arith.constant 0.000000e+00 : f32
    %341 = vector.broadcast %cst_142 : f32 to vector<16x32xf32>
    %342 = arith.maximumf %340, %341 : vector<16x32xf32>
    %343 = arith.truncf %342 : vector<16x32xf32> to vector<16x32xbf16>
    %c0_143 = arith.constant 0 : index
    %c32_144 = arith.constant 32 : index
    %344 = vector.load %arg7[%c0_143, %c32_144] : memref<32x64xbf16, #tpu.memory_space<vmem>>, vector<16x32xbf16>
    tpu.vector_store %arg7[%c0_143, %c32_144], %343 {strides = array<i32>} : memref<32x64xbf16, #tpu.memory_space<vmem>>, vector<16x32xbf16>,
    %c0_145 = arith.constant 0 : index
    %c0_146 = arith.constant 0 : index
    %345 = vector.load %arg7[%c0_145, %c0_146] : memref<32x64xbf16, #tpu.memory_space<vmem>>, vector<16x64xbf16>
    %cst_147 = arith.constant dense<0.000000e+00> : vector<16x128xf32>
    %346 = tpu.matmul %345, %5, %cst_147 {dimension_numbers = #tpu.dot_dimension_numbers<[1], [0], [0], [1], [0, 0, 1, 1], [], []>} : vector<16x64xbf16>, vector<64x128xbf16>, vector<16x128xf32> -> vector<16x128xf32>
    %347 = arith.addf %346, %11 : vector<16x128xf32>
    %348 = vector.extract_strided_slice %347 {offsets = [0, 0], sizes = [16, 64], strides = [1, 1]} : vector<16x128xf32> to vector<16x64xf32>
    %349 = arith.negf %348 : vector<16x64xf32>
    %350 = math.exp %349 : vector<16x64xf32>
    %cst_148 = arith.constant 1.000000e+00 : f32
    %351 = vector.broadcast %cst_148 : f32 to vector<16x64xf32>
    %352 = arith.addf %351, %350 : vector<16x64xf32>
    %353 = arith.divf %351, %352 : vector<16x64xf32>
    %354 = vector.extract_strided_slice %353 {offsets = [0, 0], sizes = [16, 32], strides = [1, 1]} : vector<16x64xf32> to vector<16x32xf32>
    %355 = vector.extract_strided_slice %353 {offsets = [0, 32], sizes = [16, 32], strides = [1, 1]} : vector<16x64xf32> to vector<16x32xf32>
    %356 = vector.extract_strided_slice %347 {offsets = [0, 64], sizes = [16, 32], strides = [1, 1]} : vector<16x128xf32> to vector<16x32xf32>
    %357 = vector.extract_strided_slice %347 {offsets = [0, 96], sizes = [16, 32], strides = [1, 1]} : vector<16x128xf32> to vector<16x32xf32>
    %358 = arith.mulf %354, %357 : vector<16x32xf32>
    %359 = arith.addf %356, %358 : vector<16x32xf32>
    %360 = math.tanh %359 : vector<16x32xf32>
    %cst_149 = arith.constant 1.000000e+00 : f32
    %361 = vector.broadcast %cst_149 : f32 to vector<16x32xf32>
    %362 = arith.subf %361, %355 : vector<16x32xf32>
    %363 = arith.mulf %362, %360 : vector<16x32xf32>
    %364 = arith.mulf %355, %312 : vector<16x32xf32>
    %365 = arith.addf %363, %364 : vector<16x32xf32>
    %366 = arith.truncf %365 : vector<16x32xf32> to vector<16x32xbf16>
    %cst_150 = arith.constant dense<0.000000e+00> : vector<16x32xf32>
    %367 = tpu.matmul %366, %2, %cst_150 {dimension_numbers = #tpu.dot_dimension_numbers<[1], [0], [0], [1], [0, 0, 1, 1], [], []>} : vector<16x32xbf16>, vector<32x32xbf16>, vector<16x32xf32> -> vector<16x32xf32>
    %368 = arith.addf %367, %17 : vector<16x32xf32>
    %cst_151 = arith.constant 0.000000e+00 : f32
    %369 = vector.broadcast %cst_151 : f32 to vector<16x32xf32>
    %370 = arith.maximumf %368, %369 : vector<16x32xf32>
    %371 = arith.truncf %370 : vector<16x32xf32> to vector<16x32xbf16>
    %cst_152 = arith.constant dense<0.000000e+00> : vector<16x32xf32>
    %372 = tpu.matmul %371, %3, %cst_152 {dimension_numbers = #tpu.dot_dimension_numbers<[1], [0], [0], [1], [0, 0, 1, 1], [], []>} : vector<16x32xbf16>, vector<32x32xbf16>, vector<16x32xf32> -> vector<16x32xf32>
    %373 = arith.addf %372, %20 : vector<16x32xf32>
    %cst_153 = arith.constant 0.000000e+00 : f32
    %374 = vector.broadcast %cst_153 : f32 to vector<16x32xf32>
    %375 = arith.maximumf %373, %374 : vector<16x32xf32>
    %376 = arith.truncf %375 : vector<16x32xf32> to vector<16x32xbf16>
    %cst_154 = arith.constant dense<0.000000e+00> : vector<16x32xf32>
    %377 = tpu.matmul %376, %4, %cst_154 {dimension_numbers = #tpu.dot_dimension_numbers<[1], [0], [0], [1], [0, 0, 1, 1], [], []>} : vector<16x32xbf16>, vector<32x32xbf16>, vector<16x32xf32> -> vector<16x32xf32>
    %378 = arith.addf %377, %23 : vector<16x32xf32>
    %379 = arith.addf %326, %378 : vector<16x32xf32>
    %c6 = arith.constant 6 : index
    %c0_155 = arith.constant 0 : index
    %c0_156 = arith.constant 0 : index
    %380 = vector.load %arg6[%c6, %c0_155, %c0_156] : memref<7x16x32xf32, #tpu.memory_space<vmem>>, vector<1x16x32xf32>
    %381 = vector.shape_cast %380 : vector<1x16x32xf32> to vector<16x32xf32>
    %382 = vector.shape_cast %379 : vector<16x32xf32> to vector<1x16x32xf32>
    tpu.vector_store %arg6[%c6, %c0_155, %c0_156], %382 {strides = array<i32>} : memref<7x16x32xf32, #tpu.memory_space<vmem>>, vector<1x16x32xf32>,
    return
  }
  func.func @transform_0(%arg0: i32) -> (i32, i32) {
    %c0_i32 = arith.constant 0 : i32
    %c0_i32_0 = arith.constant 0 : i32
    %c0_i32_1 = arith.constant 0 : i32
    return %c0_i32, %c0_i32_0 : i32, i32
  }
  func.func @transform_1(%arg0: i32) -> (i32, i32) {
    %c0_i32 = arith.constant 0 : i32
    %c0_i32_0 = arith.constant 0 : i32
    %c0_i32_1 = arith.constant 0 : i32
    return %c0_i32, %c0_i32_0 : i32, i32
  }
  func.func @transform_2(%arg0: i32) -> (i32, i32) {
    %c0_i32 = arith.constant 0 : i32
    %c0_i32_0 = arith.constant 0 : i32
    %c0_i32_1 = arith.constant 0 : i32
    return %c0_i32, %c0_i32_0 : i32, i32
  }
  func.func @transform_3(%arg0: i32) -> (i32, i32) {
    %c0_i32 = arith.constant 0 : i32
    %c0_i32_0 = arith.constant 0 : i32
    %c0_i32_1 = arith.constant 0 : i32
    return %c0_i32, %c0_i32_0 : i32, i32
  }
  func.func @transform_4(%arg0: i32) -> (i32, i32) {
    %c0_i32 = arith.constant 0 : i32
    %c0_i32_0 = arith.constant 0 : i32
    %c0_i32_1 = arith.constant 0 : i32
    return %c0_i32, %c0_i32_0 : i32, i32
  }
  func.func @transform_5(%arg0: i32) -> (i32, i32, i32) {
    %c0_i32 = arith.constant 0 : i32
    %c0_i32_0 = arith.constant 0 : i32
    %c0_i32_1 = arith.constant 0 : i32
    %c0_i32_2 = arith.constant 0 : i32
    return %c0_i32, %c0_i32_0, %c0_i32_1 : i32, i32, i32
  }
}

</mosaic_0001>

<llo_original>
// kernel: tpu_custom_call.1
$region0: #{tpu_custom_call.1}
  #allocation0 [shape = 'u32[]', space=smem, size = 0x4, offset = 0x4, fixed_abs, tag = 'smem constant byte address 0x4 - core index']
  #allocation1 [shape = 'u32[72,128]{1,0:T(1,128)}', space=vmem, size = 0x9000, scoped, tag = 'internal scratch']
  #allocation2 [shape = 'bf16[32,64]{1,0:T(8,128)(2,1)}', space=vmem, size = 0x2000, scoped, tag = 'scratch operand']
  %s0 = inlined_call_operand.vmem [shape: f32[32,32], index: 0, kind: input, shape index: {}]
  %s1 = inlined_call_operand.vmem [shape: bf16[32,32], index: 1, kind: input, shape index: {}]
  %s2 = inlined_call_operand.vmem [shape: bf16[64,128], index: 2, kind: input, shape index: {}]
  %s3 = inlined_call_operand.vmem [shape: bf16[160,32], index: 3, kind: input, shape index: {}]
  %s4 = inlined_call_operand.vmem [shape: f32[2,128], index: 4, kind: input, shape index: {}]
  %s5 = inlined_call_operand.hbm [shape: f32[7,16,32], index: 5, kind: output, shape index: {}]
  %s6 = sld [smem:[#allocation0]]
  $region30: #{tpu_custom_call.1} parent=0
    _
  %s8 = ssub.s32 1, %s6
  %s9 = scalar_select 0, %s8, %s6
  $region1: #{tpu_custom_call.1} parent=0
    #allocation3 [shape = 'u8[57344]{0}', space=vmem, size = 0xe000, scoped, tag = 'output window, operand 0, single buffered']
    #allocation4 [shape = 's32[1]{0}', space=sflag, size = 0x4, scoped, tag = 'scoped memory for tpu_custom_call.1']
    %10 = vsyncpa [#allocation4], 0
    // Predicated region
    $region2: #{tpu_custom_call.1} parent=1 // pred_check
      _
    $region3: #{tpu_custom_call.1} parent=1 // pred_check_branch
      %12 = sbr.rel (0) target = $region5
    $region4: #{tpu_custom_call.1} parent=1 // pred_region
      _
    $region5: #{tpu_custom_call.1} parent=1 // pred_fallthru
      _
    // Predicated region
    $region6: #{tpu_custom_call.1} parent=1 // pred_check
      _
    $region7: #{tpu_custom_call.1} parent=1 // pred_check_branch
      %14 = sbr.rel (0) target = $region9
    $region8: #{tpu_custom_call.1} parent=1 // pred_region
      _
    $region9: #{tpu_custom_call.1} parent=1 // pred_fallthru
      _
    // Predicated region
    $region10: #{tpu_custom_call.1} parent=1 // pred_check
      _
    $region11: #{tpu_custom_call.1} parent=1 // pred_check_branch
      %16 = sbr.rel (0) target = $region13
    $region12: #{tpu_custom_call.1} parent=1 // pred_region
      _
    $region13: #{tpu_custom_call.1} parent=1 // pred_fallthru
      _
    // Predicated region
    $region14: #{tpu_custom_call.1} parent=1 // pred_check
      _
    $region15: #{tpu_custom_call.1} parent=1 // pred_check_branch
      %18 = sbr.rel (0) target = $region17
    $region16: #{tpu_custom_call.1} parent=1 // pred_region
      _
    $region17: #{tpu_custom_call.1} parent=1 // pred_fallthru
      _
    // Predicated region
    $region18: #{tpu_custom_call.1} parent=1 // pred_check
      _
    $region19: #{tpu_custom_call.1} parent=1 // pred_check_branch
      %20 = sbr.rel (0) target = $region21
    $region20: #{tpu_custom_call.1} parent=1 // pred_region
      _
    $region21: #{tpu_custom_call.1} parent=1 // pred_fallthru
      _
    %v22 = vld [vmem:[%s3] sm:$0xf]
    %v23 = vld [vmem:[%s3 + $0x4] sm:$0xf]
    %v24 = vld [vmem:[%s3 + $0x8] sm:$0xf]
    %v25 = vld [vmem:[%s3 + $0xc] sm:$0xf]
    %v26 = vld [vmem:[%s3 + $0x10] sm:$0xf]
    %v27 = vld [vmem:[%s3 + $0x14] sm:$0xf]
    %v28 = vld [vmem:[%s3 + $0x18] sm:$0xf]
    %v29 = vld [vmem:[%s3 + $0x1c] sm:$0xf]
    %v30 = vld [vmem:[%s3 + $0x20] sm:$0xf]
    %v31 = vld [vmem:[%s3 + $0x24] sm:$0xf]
    %v32 = vld [vmem:[%s3 + $0x28] sm:$0xf]
    %v33 = vld [vmem:[%s3 + $0x2c] sm:$0xf]
    %v34 = vld [vmem:[%s3 + $0x30] sm:$0xf]
    %v35 = vld [vmem:[%s3 + $0x34] sm:$0xf]
    %v36 = vld [vmem:[%s3 + $0x38] sm:$0xf]
    %v37 = vld [vmem:[%s3 + $0x3c] sm:$0xf]
    %v38 = vld [vmem:[%s3 + $0x40] sm:$0xf]
    %v39 = vld [vmem:[%s3 + $0x44] sm:$0xf]
    %v40 = vld [vmem:[%s3 + $0x48] sm:$0xf]
    %v41 = vld [vmem:[%s3 + $0x4c] sm:$0xf]
    %v42 = vld [vmem:[%s2] sm:$0xf]
    %v43 = vld [vmem:[%s2 + $0x4] sm:$0xf]
    %v44 = vld [vmem:[%s2 + $0x8] sm:$0xf]
    %v45 = vld [vmem:[%s2 + $0xc] sm:$0xf]
    %v46 = vld [vmem:[%s2 + $0x10] sm:$0xf]
    %v47 = vld [vmem:[%s2 + $0x14] sm:$0xf]
    %v48 = vld [vmem:[%s2 + $0x18] sm:$0xf]
    %v49 = vld [vmem:[%s2 + $0x1c] sm:$0xf]
    %v50 = vld [vmem:[%s1] sm:$0xf]
    %v51 = vld [vmem:[%s1 + $0x4] sm:$0xf]
    %v52 = vld [vmem:[%s1 + $0x8] sm:$0xf]
    %v53 = vld [vmem:[%s1 + $0xc] sm:$0xf]
    %v54 = vld [vmem:[%s4] sm:$0x3]
    %v55 = vperm.slane %v54, 0
    %v56 = vperm.slane %v54, 1
    %v57 = vld [vmem:[%s0] sm:$0xff]
    %v58 = vld [vmem:[%s0 + $0x8] sm:$0xff]
    %v59 = vld [vmem:[%s0 + $0x10] sm:$0xff]
    %v60 = vld [vmem:[%s0 + $0x18] sm:$0xff]
    %v61 = vpack.c.bf16 %v57, %v57
    %v62 = vpack.c.bf16 %v58, %v58
    %v63 = vpack.c.bf16 %v59, %v59
    %v64 = vpack.c.bf16 %v60, %v60
    %v69 = vunpack.c.l.b16 %v61
    %v70 = vunpack.c.l.b16 %v62
    %v71 = vunpack.c.l.b16 %v63
    %v72 = vunpack.c.l.b16 %v64
    %v73 = vpack.c.b16 %v70, %v69
    %v74 = vpack.c.b16 %v72, %v71
    %v79 = vunpack.c.l.b16 %v22
    %v80 = vunpack.c.l.b16 %v23
    %v81 = vunpack.c.l.b16 %v24
    %v82 = vunpack.c.l.b16 %v25
    %v83 = vpack.c.b16 %v80, %v79
    %v84 = vpack.c.b16 %v82, %v81
    %vm87 = vcmask 261120
    %v89 = vsel %vm87, %v73, 0
    %v92 = vsel %vm87, %v74, 0
    %94 = vmatpush.bf16.msra.mxu0 0
    %95 = vmatpush.bf16.msra.mxu0 0
    %96 = vmatpush.bf16.msra.mxu0 0
    %97 = vmatpush.bf16.msra.mxu0 0
    %98 = vmatpush.bf16.msra.mxu0 0
    %99 = vmatpush.bf16.msra.mxu0 0
    %100 = vmatpush.bf16.msra.mxu0 %v84
    %101 = vmatpush.bf16.msra.mxu0 %v83
    %102 = vmatmul.bf16.gmra.mxu0 %v89
    %v103 = vpop.f32.mrf.mxu0
    %v104 = vadd.f32 0.0, %v103
    %v105 = vpop.f32.mrf.mxu0
    %v106 = vadd.f32 0.0, %v105
    %107 = vmatmul.bf16.gmra.mxu0 %v92
    %v108 = vpop.f32.mrf.mxu0
    %v109 = vadd.f32 0.0, %v108
    %v110 = vpop.f32.mrf.mxu0
    %v111 = vadd.f32 0.0, %v110
    %112 = vdwg.mxu0
    %v113 = vpack.c.bf16 %v106, %v104
    %v114 = vpack.c.bf16 %v111, %v109
    %v119 = vunpack.c.l.b16 %v50
    %v120 = vunpack.c.l.b16 %v51
    %v121 = vunpack.c.l.b16 %v52
    %v122 = vunpack.c.l.b16 %v53
    %v123 = vpack.c.b16 %v120, %v119
    %v124 = vpack.c.b16 %v122, %v121
    %v126 = vsel %vm87, %v123, 0
    %v129 = vsel %vm87, %v124, 0
    %131 = vmatpush.bf16.msra.mxu0 0
    %132 = vmatpush.bf16.msra.mxu0 0
    %133 = vmatpush.bf16.msra.mxu0 0
    %134 = vmatpush.bf16.msra.mxu0 0
    %135 = vmatpush.bf16.msra.mxu0 0
    %136 = vmatpush.bf16.msra.mxu0 0
    %137 = vmatpush.bf16.msra.mxu0 %v114
    %138 = vmatpush.bf16.msra.mxu0 %v113
    %139 = vmatmul.bf16.gmra.mxu0 %v126
    %v140 = vpop.f32.mrf.mxu0
    %v141 = vadd.f32 0.0, %v140
    %v142 = vpop.f32.mrf.mxu0
    %v143 = vadd.f32 0.0, %v142
    %144 = vmatmul.bf16.gmra.mxu0 %v129
    %v145 = vpop.f32.mrf.mxu0
    %v146 = vadd.f32 0.0, %v145
    %v147 = vpop.f32.mrf.mxu0
    %v148 = vadd.f32 0.0, %v147
    %149 = vdwg.mxu0
    %v150 = vmax.f32 %v141, 0.0
    %v151 = vmax.f32 %v143, 0.0
    %v152 = vmax.f32 %v146, 0.0
    %v153 = vmax.f32 %v148, 0.0
    %v154 = vpack.c.bf16 %v151, %v150
    %v155 = vpack.c.bf16 %v153, %v152
    %v160 = vunpack.c.l.b16 %v26
    %v161 = vunpack.c.l.b16 %v27
    %v162 = vunpack.c.l.b16 %v28
    %v163 = vunpack.c.l.b16 %v29
    %v164 = vpack.c.b16 %v161, %v160
    %v165 = vpack.c.b16 %v163, %v162
    %v169 = vsel %vm87, %v154, 0
    %v172 = vsel %vm87, %v155, 0
    %174 = vmatpush.bf16.msra.mxu0 0
    %175 = vmatpush.bf16.msra.mxu0 0
    %176 = vmatpush.bf16.msra.mxu0 0
    %177 = vmatpush.bf16.msra.mxu0 0
    %178 = vmatpush.bf16.msra.mxu0 0
    %179 = vmatpush.bf16.msra.mxu0 0
    %180 = vmatpush.bf16.msra.mxu0 %v165
    %181 = vmatpush.bf16.msra.mxu0 %v164
    %182 = vmatmul.bf16.gmra.mxu0 %v169
    %v183 = vpop.f32.mrf.mxu0
    %v184 = vadd.f32 0.0, %v183
    %v185 = vpop.f32.mrf.mxu0
    %v186 = vadd.f32 0.0, %v185
    %187 = vmatmul.bf16.gmra.mxu0 %v172
    %v188 = vpop.f32.mrf.mxu0
    %v189 = vadd.f32 0.0, %v188
    %v190 = vpop.f32.mrf.mxu0
    %v191 = vadd.f32 0.0, %v190
    %192 = vdwg.mxu0
    %v193 = vpack.c.bf16 %v186, %v184
    %v194 = vpack.c.bf16 %v191, %v189
    %195 = vmatpush.bf16.msra.mxu0 0
    %196 = vmatpush.bf16.msra.mxu0 0
    %197 = vmatpush.bf16.msra.mxu0 0
    %198 = vmatpush.bf16.msra.mxu0 0
    %199 = vmatpush.bf16.msra.mxu0 0
    %200 = vmatpush.bf16.msra.mxu0 0
    %201 = vmatpush.bf16.msra.mxu0 %v194
    %202 = vmatpush.bf16.msra.mxu0 %v193
    %203 = vmatmul.bf16.gmra.mxu0 %v126
    %v204 = vpop.f32.mrf.mxu0
    %v205 = vadd.f32 0.0, %v204
    %v206 = vpop.f32.mrf.mxu0
    %v207 = vadd.f32 0.0, %v206
    %208 = vmatmul.bf16.gmra.mxu0 %v129
    %v209 = vpop.f32.mrf.mxu0
    %v210 = vadd.f32 0.0, %v209
    %v211 = vpop.f32.mrf.mxu0
    %v212 = vadd.f32 0.0, %v211
    %213 = vdwg.mxu0
    %v214 = vmax.f32 %v205, 0.0
    %v215 = vmax.f32 %v207, 0.0
    %v216 = vmax.f32 %v210, 0.0
    %v217 = vmax.f32 %v212, 0.0
    %vm218 = vcmask 257024
    %219 = vst.msk [vmem:[#allocation2] sm:$0xf] %vm218, %v61
    %220 = vst.msk [vmem:[#allocation2 + $0x4] sm:$0xf] %vm218, %v62
    %221 = vst.msk [vmem:[#allocation2 + $0x8] sm:$0xf] %vm218, %v63
    %222 = vst.msk [vmem:[#allocation2 + $0xc] sm:$0xf] %vm218, %v64
    %v223 = vpack.c.bf16 %v214, %v214
    %v224 = vpack.c.bf16 %v215, %v215
    %v225 = vpack.c.bf16 %v216, %v216
    %v226 = vpack.c.bf16 %v217, %v217
    %231 = vrot.lane.b32.xlu0 %v223, 32
    %v232 = vpop.permute.xlu0 %231
    %233 = vrot.lane.b32.xlu0 %v224, 32
    %v234 = vpop.permute.xlu0 %233
    %235 = vrot.lane.b32.xlu0 %v225, 32
    %v236 = vpop.permute.xlu0 %235
    %237 = vrot.lane.b32.xlu0 %v226, 32
    %v238 = vpop.permute.xlu0 %237
    %vm243 = vcmask 519424
    %244 = vst.msk [vmem:[#allocation2] sm:$0xf] %vm243, %v232
    %245 = vst.msk [vmem:[#allocation2 + $0x4] sm:$0xf] %vm243, %v234
    %246 = vst.msk [vmem:[#allocation2 + $0x8] sm:$0xf] %vm243, %v236
    %247 = vst.msk [vmem:[#allocation2 + $0xc] sm:$0xf] %vm243, %v238
    %v248 = vld [vmem:[#allocation2] sm:$0xf]
    %v249 = vld [vmem:[#allocation2 + $0x4] sm:$0xf]
    %v250 = vld [vmem:[#allocation2 + $0x8] sm:$0xf]
    %v251 = vld [vmem:[#allocation2 + $0xc] sm:$0xf]
    %v256 = vunpack.c.l.b16 %v248
    %v257 = vunpack.c.l.b16 %v249
    %v258 = vunpack.c.l.b16 %v250
    %v259 = vunpack.c.l.b16 %v251
    %v260 = vpack.c.b16 %v257, %v256
    %v261 = vpack.c.b16 %v259, %v258
    %v270 = vunpack.c.l.b16 %v42
    %v271 = vunpack.c.l.b16 %v43
    %v272 = vunpack.c.l.b16 %v44
    %v273 = vunpack.c.l.b16 %v45
    %v274 = vunpack.c.l.b16 %v46
    %v275 = vunpack.c.l.b16 %v47
    %v276 = vunpack.c.l.b16 %v48
    %v277 = vunpack.c.l.b16 %v49
    %v278 = vpack.c.b16 %v271, %v270
    %v279 = vpack.c.b16 %v273, %v272
    %v280 = vpack.c.b16 %v275, %v274
    %v281 = vpack.c.b16 %v277, %v276
    %vm286 = vcmask 523264
    %v288 = vsel %vm286, %v260, 0
    %v291 = vsel %vm286, %v261, 0
    %293 = vmatpush.bf16.msra.mxu0 0
    %294 = vmatpush.bf16.msra.mxu0 0
    %295 = vmatpush.bf16.msra.mxu0 0
    %296 = vmatpush.bf16.msra.mxu0 0
    %297 = vmatpush.bf16.msra.mxu0 %v281
    %298 = vmatpush.bf16.msra.mxu0 %v280
    %299 = vmatpush.bf16.msra.mxu0 %v279
    %300 = vmatpush.bf16.msra.mxu0 %v278
    %301 = vmatmul.bf16.gmra.mxu0 %v288
    %v302 = vpop.f32.mrf.mxu0
    %v303 = vadd.f32 %v55, %v302
    %v304 = vpop.f32.mrf.mxu0
    %v305 = vadd.f32 %v55, %v304
    %306 = vmatmul.bf16.gmra.mxu0 %v291
    %v307 = vpop.f32.mrf.mxu0
    %v308 = vadd.f32 %v55, %v307
    %v309 = vpop.f32.mrf.mxu0
    %v310 = vadd.f32 %v55, %v309
    %311 = vdwg.mxu0
    %v312 = vxor.u32 %v303, 2147483648
    %v313 = vxor.u32 %v305, 2147483648
    %v314 = vmul.f32 %v312, 1.442695
    %v315 = vpow.pop %v314
    %v316 = vmul.f32 %v313, 1.442695
    %v317 = vpow.pop %v316
    %v318 = vadd.f32 %v315, 1.0
    %v319 = vadd.f32 %v317, 1.0
    %v320 = vrcp.pop %v318
    %v321 = vmul.f32 %v318, %v320
    %v322 = vsub.f32 1.0, %v321
    %v323 = vmul.f32 %v320, %v322
    %v324 = vadd.f32 %v320, %v323
    %vm325 = vweird.f32 %v318
    %vm326 = vweird.f32 %v320
    %vm327 = vmor %vm325, %vm326
    %v328 = vsel %vm327, %v320, %v324
    %v329 = vand.u32 2147483647, %v318
    %vm330 = vcmp.eq.f32.partialorder %v329, 8.507059e+37
    %v331 = vand.u32 %v318, 2147483648
    %v332 = vor.u32 1.1754944e-38, %v331
    %v333 = vsel %vm330, %v332, %v328
    %v334 = vmul.f32 1.0, %v333
    %v335 = vrcp.pop %v319
    %v336 = vmul.f32 %v319, %v335
    %v337 = vsub.f32 1.0, %v336
    %v338 = vmul.f32 %v335, %v337
    %v339 = vadd.f32 %v335, %v338
    %vm340 = vweird.f32 %v319
    %vm341 = vweird.f32 %v335
    %vm342 = vmor %vm340, %vm341
    %v343 = vsel %vm342, %v335, %v339
    %v344 = vand.u32 2147483647, %v319
    %vm345 = vcmp.eq.f32.partialorder %v344, 8.507059e+37
    %v346 = vand.u32 %v319, 2147483648
    %v347 = vor.u32 1.1754944e-38, %v346
    %v348 = vsel %vm345, %v347, %v343
    %v349 = vmul.f32 1.0, %v348
    %352 = vrot.lane.b32.xlu0 %v303, 32
    %v353 = vpop.permute.xlu0 %352
    %354 = vrot.lane.b32.xlu0 %v305, 32
    %v355 = vpop.permute.xlu0 %354
    %v358 = vmul.f32 %v334, %v353
    %v359 = vmul.f32 %v349, %v355
    %362 = vrot.lane.b32.xlu0 %v358, 64
    %v363 = vpop.permute.xlu0 %362
    %364 = vrot.lane.b32.xlu0 %v359, 64
    %v365 = vpop.permute.xlu0 %364
    %v368 = vadd.f32 %v303, %v363
    %v369 = vadd.f32 %v305, %v365
    %v370 = vtanh.pop %v368
    %v371 = vtanh.pop %v369
    %v372 = vsub.f32 1.0, %v334
    %v373 = vsub.f32 1.0, %v349
    %376 = vrot.lane.b32.xlu0 %v370, 96
    %v377 = vpop.permute.xlu0 %376
    %378 = vrot.lane.b32.xlu0 %v371, 96
    %v379 = vpop.permute.xlu0 %378
    %v382 = vmul.f32 %v372, %v377
    %v383 = vmul.f32 %v373, %v379
    %v384 = vmul.f32 %v334, 0.0
    %v385 = vmul.f32 %v349, 0.0
    %v386 = vadd.f32 %v382, %v384
    %v387 = vadd.f32 %v383, %v385
    %v388 = vpack.c.bf16 %v387, %v386
    %390 = vrot.lane.b32.xlu0 %v388, 96
    %v391 = vpop.permute.xlu0 %390
    %v396 = vunpack.c.l.b16 %v30
    %v397 = vunpack.c.l.b16 %v31
    %v398 = vunpack.c.l.b16 %v32
    %v399 = vunpack.c.l.b16 %v33
    %v400 = vpack.c.b16 %v397, %v396
    %v401 = vpack.c.b16 %v399, %v398
    %v405 = vsel %vm87, %v391, 0
    %407 = vmatpush.bf16.msra.mxu0 0
    %408 = vmatpush.bf16.msra.mxu0 0
    %409 = vmatpush.bf16.msra.mxu0 0
    %410 = vmatpush.bf16.msra.mxu0 0
    %411 = vmatpush.bf16.msra.mxu0 0
    %412 = vmatpush.bf16.msra.mxu0 0
    %413 = vmatpush.bf16.msra.mxu0 %v401
    %414 = vmatpush.bf16.msra.mxu0 %v400
    %415 = vmatmul.bf16.gmra.mxu0 %v405
    %v416 = vpop.f32.mrf.mxu0
    %v417 = vadd.f32 %v56, %v416
    %v418 = vpop.f32.mrf.mxu0
    %v419 = vadd.f32 %v56, %v418
    %420 = vdwg.mxu0
    %v421 = vmax.f32 %v417, 0.0
    %v422 = vmax.f32 %v419, 0.0
    %v423 = vpack.c.bf16 %v422, %v421
    %v428 = vunpack.c.l.b16 %v34
    %v429 = vunpack.c.l.b16 %v35
    %v430 = vunpack.c.l.b16 %v36
    %v431 = vunpack.c.l.b16 %v37
    %v432 = vpack.c.b16 %v429, %v428
    %v433 = vpack.c.b16 %v431, %v430
    %437 = vrot.lane.b32.xlu0 %v56, 96
    %v438 = vpop.permute.xlu0 %437
    %v441 = vsel %vm87, %v423, 0
    %443 = vmatpush.bf16.msra.mxu0 0
    %444 = vmatpush.bf16.msra.mxu0 0
    %445 = vmatpush.bf16.msra.mxu0 0
    %446 = vmatpush.bf16.msra.mxu0 0
    %447 = vmatpush.bf16.msra.mxu0 0
    %448 = vmatpush.bf16.msra.mxu0 0
    %449 = vmatpush.bf16.msra.mxu0 %v433
    %450 = vmatpush.bf16.msra.mxu0 %v432
    %451 = vmatmul.bf16.gmra.mxu0 %v441
    %v452 = vpop.f32.mrf.mxu0
    %v453 = vadd.f32 %v438, %v452
    %v454 = vpop.f32.mrf.mxu0
    %v455 = vadd.f32 %v438, %v454
    %456 = vdwg.mxu0
    %v457 = vmax.f32 %v453, 0.0
    %v458 = vmax.f32 %v455, 0.0
    %v459 = vpack.c.bf16 %v458, %v457
    %v464 = vunpack.c.l.b16 %v38
    %v465 = vunpack.c.l.b16 %v39
    %v466 = vunpack.c.l.b16 %v40
    %v467 = vunpack.c.l.b16 %v41
    %v468 = vpack.c.b16 %v465, %v464
    %v469 = vpack.c.b16 %v467, %v466
    %472 = vrot.lane.b32.xlu0 %v56, 64
    %v473 = vpop.permute.xlu0 %472
    %v476 = vsel %vm87, %v459, 0
    %478 = vmatpush.bf16.msra.mxu0 0
    %479 = vmatpush.bf16.msra.mxu0 0
    %480 = vmatpush.bf16.msra.mxu0 0
    %481 = vmatpush.bf16.msra.mxu0 0
    %482 = vmatpush.bf16.msra.mxu0 0
    %483 = vmatpush.bf16.msra.mxu0 0
    %484 = vmatpush.bf16.msra.mxu0 %v469
    %485 = vmatpush.bf16.msra.mxu0 %v468
    %486 = vmatmul.bf16.gmra.mxu0 %v476
    %v487 = vpop.f32.mrf.mxu0
    %v488 = vadd.f32 %v473, %v487
    %v489 = vpop.f32.mrf.mxu0
    %v490 = vadd.f32 %v473, %v489
    %491 = vdwg.mxu0
    %v492 = vadd.f32 %v57, %v488
    %v493 = vadd.f32 %v58, %v490
    %494 = vst.msk [vmem:[#allocation3] sm:$0xff] %vm87, %v492
    %495 = vst.msk [vmem:[#allocation3 + $0x8] sm:$0xff] %vm87, %v493
    %v496 = vpack.c.bf16 %v492, %v492
    %v497 = vpack.c.bf16 %v493, %v493
    %498 = vst.msk [vmem:[#allocation2] sm:$0xf] %vm218, %v496
    %499 = vst.msk [vmem:[#allocation2 + $0x4] sm:$0xf] %vm218, %v497
    %v502 = vunpack.c.l.b16 %v496
    %v503 = vunpack.c.l.b16 %v497
    %v504 = vpack.c.b16 %v503, %v502
    %v506 = vsel %vm87, %v504, 0
    %508 = vmatpush.bf16.msra.mxu0 0
    %509 = vmatpush.bf16.msra.mxu0 0
    %510 = vmatpush.bf16.msra.mxu0 0
    %511 = vmatpush.bf16.msra.mxu0 0
    %512 = vmatpush.bf16.msra.mxu0 0
    %513 = vmatpush.bf16.msra.mxu0 0
    %514 = vmatpush.bf16.msra.mxu0 %v84
    %515 = vmatpush.bf16.msra.mxu0 %v83
    %516 = vmatmul.bf16.gmra.mxu0 %v506
    %v517 = vpop.f32.mrf.mxu0
    %v518 = vadd.f32 0.0, %v517
    %v519 = vpop.f32.mrf.mxu0
    %v520 = vadd.f32 0.0, %v519
    %521 = vdwg.mxu0
    %v522 = vpack.c.bf16 %v520, %v518
    %vm523 = vcmask 130048
    %v524 = vsel %vm523, %v123, 0
    %526 = vmatpush.bf16.msra.mxu0 0
    %527 = vmatpush.bf16.msra.mxu0 0
    %528 = vmatpush.bf16.msra.mxu0 0
    %529 = vmatpush.bf16.msra.mxu0 0
    %530 = vmatpush.bf16.msra.mxu0 0
    %531 = vmatpush.bf16.msra.mxu0 0
    %532 = vmatpush.bf16.msra.mxu0 0
    %533 = vmatpush.bf16.msra.mxu0 %v522
    %534 = vmatmul.bf16.gmra.mxu0 %v524
    %v535 = vpop.f32.mrf.mxu0
    %v536 = vadd.f32 0.0, %v535
    %v537 = vpop.f32.mrf.mxu0
    %v538 = vadd.f32 0.0, %v537
    %539 = vdwg.mxu0
    %v540 = vmax.f32 %v536, 0.0
    %v541 = vmax.f32 %v538, 0.0
    %v542 = vpack.c.bf16 %v541, %v540
    %v544 = vsel %vm87, %v542, 0
    %546 = vmatpush.bf16.msra.mxu0 0
    %547 = vmatpush.bf16.msra.mxu0 0
    %548 = vmatpush.bf16.msra.mxu0 0
    %549 = vmatpush.bf16.msra.mxu0 0
    %550 = vmatpush.bf16.msra.mxu0 0
    %551 = vmatpush.bf16.msra.mxu0 0
    %552 = vmatpush.bf16.msra.mxu0 %v165
    %553 = vmatpush.bf16.msra.mxu0 %v164
    %554 = vmatmul.bf16.gmra.mxu0 %v544
    %v555 = vpop.f32.mrf.mxu0
    %v556 = vadd.f32 0.0, %v555
    %v557 = vpop.f32.mrf.mxu0
    %v558 = vadd.f32 0.0, %v557
    %559 = vdwg.mxu0
    %v560 = vpack.c.bf16 %v558, %v556
    %561 = vmatpush.bf16.msra.mxu0 0
    %562 = vmatpush.bf16.msra.mxu0 0
    %563 = vmatpush.bf16.msra.mxu0 0
    %564 = vmatpush.bf16.msra.mxu0 0
    %565 = vmatpush.bf16.msra.mxu0 0
    %566 = vmatpush.bf16.msra.mxu0 0
    %567 = vmatpush.bf16.msra.mxu0 0
    %568 = vmatpush.bf16.msra.mxu0 %v560
    %569 = vmatmul.bf16.gmra.mxu0 %v524
    %v570 = vpop.f32.mrf.mxu0
    %v571 = vadd.f32 0.0, %v570
    %v572 = vpop.f32.mrf.mxu0
    %v573 = vadd.f32 0.0, %v572
    %574 = vdwg.mxu0
    %v575 = vmax.f32 %v571, 0.0
    %v576 = vmax.f32 %v573, 0.0
    %v577 = vpack.c.bf16 %v575, %v575
    %v578 = vpack.c.bf16 %v576, %v576
    %581 = vrot.lane.b32.xlu0 %v577, 32
    %v582 = vpop.permute.xlu0 %581
    %583 = vrot.lane.b32.xlu0 %v578, 32
    %v584 = vpop.permute.xlu0 %583
    %587 = vst.msk [vmem:[#allocation2] sm:$0xf] %vm243, %v582
    %588 = vst.msk [vmem:[#allocation2 + $0x4] sm:$0xf] %vm243, %v584
    %v589 = vld [vmem:[#allocation2] sm:$0xf]
    %v590 = vld [vmem:[#allocation2 + $0x4] sm:$0xf]
    %v593 = vunpack.c.l.b16 %v589
    %v594 = vunpack.c.l.b16 %v590
    %v595 = vpack.c.b16 %v594, %v593
    %v597 = vsel %vm286, %v595, 0
    %599 = vmatpush.bf16.msra.mxu0 0
    %600 = vmatpush.bf16.msra.mxu0 0
    %601 = vmatpush.bf16.msra.mxu0 0
    %602 = vmatpush.bf16.msra.mxu0 0
    %603 = vmatpush.bf16.msra.mxu0 %v281
    %604 = vmatpush.bf16.msra.mxu0 %v280
    %605 = vmatpush.bf16.msra.mxu0 %v279
    %606 = vmatpush.bf16.msra.mxu0 %v278
    %607 = vmatmul.bf16.gmra.mxu0 %v597
    %v608 = vpop.f32.mrf.mxu0
    %v609 = vadd.f32 %v55, %v608
    %v610 = vpop.f32.mrf.mxu0
    %v611 = vadd.f32 %v55, %v610
    %612 = vdwg.mxu0
    %v613 = vxor.u32 %v609, 2147483648
    %v614 = vxor.u32 %v611, 2147483648
    %v615 = vmul.f32 %v613, 1.442695
    %v616 = vpow.pop %v615
    %v617 = vmul.f32 %v614, 1.442695
    %v618 = vpow.pop %v617
    %v619 = vadd.f32 %v616, 1.0
    %v620 = vadd.f32 %v618, 1.0
    %v621 = vrcp.pop %v619
    %v622 = vmul.f32 %v619, %v621
    %v623 = vsub.f32 1.0, %v622
    %v624 = vmul.f32 %v621, %v623
    %v625 = vadd.f32 %v621, %v624
    %vm626 = vweird.f32 %v619
    %vm627 = vweird.f32 %v621
    %vm628 = vmor %vm626, %vm627
    %v629 = vsel %vm628, %v621, %v625
    %v630 = vand.u32 2147483647, %v619
    %vm631 = vcmp.eq.f32.partialorder %v630, 8.507059e+37
    %v632 = vand.u32 %v619, 2147483648
    %v633 = vor.u32 1.1754944e-38, %v632
    %v634 = vsel %vm631, %v633, %v629
    %v635 = vmul.f32 1.0, %v634
    %v636 = vrcp.pop %v620
    %v637 = vmul.f32 %v620, %v636
    %v638 = vsub.f32 1.0, %v637
    %v639 = vmul.f32 %v636, %v638
    %v640 = vadd.f32 %v636, %v639
    %vm641 = vweird.f32 %v620
    %vm642 = vweird.f32 %v636
    %vm643 = vmor %vm641, %vm642
    %v644 = vsel %vm643, %v636, %v640
    %v645 = vand.u32 2147483647, %v620
    %vm646 = vcmp.eq.f32.partialorder %v645, 8.507059e+37
    %v647 = vand.u32 %v620, 2147483648
    %v648 = vor.u32 1.1754944e-38, %v647
    %v649 = vsel %vm646, %v648, %v644
    %v650 = vmul.f32 1.0, %v649
    %653 = vrot.lane.b32.xlu0 %v609, 32
    %v654 = vpop.permute.xlu0 %653
    %655 = vrot.lane.b32.xlu0 %v611, 32
    %v656 = vpop.permute.xlu0 %655
    %v659 = vmul.f32 %v635, %v654
    %v660 = vmul.f32 %v650, %v656
    %663 = vrot.lane.b32.xlu0 %v659, 64
    %v664 = vpop.permute.xlu0 %663
    %665 = vrot.lane.b32.xlu0 %v660, 64
    %v666 = vpop.permute.xlu0 %665
    %v669 = vadd.f32 %v609, %v664
    %v670 = vadd.f32 %v611, %v666
    %v671 = vtanh.pop %v669
    %v672 = vtanh.pop %v670
    %v673 = vsub.f32 1.0, %v635
    %v674 = vsub.f32 1.0, %v650
    %677 = vrot.lane.b32.xlu0 %v671, 96
    %v678 = vpop.permute.xlu0 %677
    %679 = vrot.lane.b32.xlu0 %v672, 96
    %v680 = vpop.permute.xlu0 %679
    %v683 = vmul.f32 %v673, %v678
    %v684 = vmul.f32 %v674, %v680
    %v685 = vmul.f32 %v635, %v386
    %v686 = vmul.f32 %v650, %v387
    %v687 = vadd.f32 %v683, %v685
    %v688 = vadd.f32 %v684, %v686
    %v689 = vpack.c.bf16 %v688, %v687
    %691 = vrot.lane.b32.xlu0 %v689, 96
    %v692 = vpop.permute.xlu0 %691
    %v694 = vsel %vm87, %v692, 0
    %696 = vmatpush.bf16.msra.mxu0 0
    %697 = vmatpush.bf16.msra.mxu0 0
    %698 = vmatpush.bf16.msra.mxu0 0
    %699 = vmatpush.bf16.msra.mxu0 0
    %700 = vmatpush.bf16.msra.mxu0 0
    %701 = vmatpush.bf16.msra.mxu0 0
    %702 = vmatpush.bf16.msra.mxu0 %v401
    %703 = vmatpush.bf16.msra.mxu0 %v400
    %704 = vmatmul.bf16.gmra.mxu0 %v694
    %v705 = vpop.f32.mrf.mxu0
    %v706 = vadd.f32 %v56, %v705
    %v707 = vpop.f32.mrf.mxu0
    %v708 = vadd.f32 %v56, %v707
    %709 = vdwg.mxu0
    %v710 = vmax.f32 %v706, 0.0
    %v711 = vmax.f32 %v708, 0.0
    %v712 = vpack.c.bf16 %v711, %v710
    %v714 = vsel %vm87, %v712, 0
    %716 = vmatpush.bf16.msra.mxu0 0
    %717 = vmatpush.bf16.msra.mxu0 0
    %718 = vmatpush.bf16.msra.mxu0 0
    %719 = vmatpush.bf16.msra.mxu0 0
    %720 = vmatpush.bf16.msra.mxu0 0
    %721 = vmatpush.bf16.msra.mxu0 0
    %722 = vmatpush.bf16.msra.mxu0 %v433
    %723 = vmatpush.bf16.msra.mxu0 %v432
    %724 = vmatmul.bf16.gmra.mxu0 %v714
    %v725 = vpop.f32.mrf.mxu0
    %v726 = vadd.f32 %v438, %v725
    %v727 = vpop.f32.mrf.mxu0
    %v728 = vadd.f32 %v438, %v727
    %729 = vdwg.mxu0
    %v730 = vmax.f32 %v726, 0.0
    %v731 = vmax.f32 %v728, 0.0
    %v732 = vpack.c.bf16 %v731, %v730
    %v734 = vsel %vm87, %v732, 0
    %736 = vmatpush.bf16.msra.mxu0 0
    %737 = vmatpush.bf16.msra.mxu0 0
    %738 = vmatpush.bf16.msra.mxu0 0
    %739 = vmatpush.bf16.msra.mxu0 0
    %740 = vmatpush.bf16.msra.mxu0 0
    %741 = vmatpush.bf16.msra.mxu0 0
    %742 = vmatpush.bf16.msra.mxu0 %v469
    %743 = vmatpush.bf16.msra.mxu0 %v468
    %744 = vmatmul.bf16.gmra.mxu0 %v734
    %v745 = vpop.f32.mrf.mxu0
    %v746 = vadd.f32 %v473, %v745
    %v747 = vpop.f32.mrf.mxu0
    %v748 = vadd.f32 %v473, %v747
    %749 = vdwg.mxu0
    %v750 = vadd.f32 %v492, %v746
    %v751 = vadd.f32 %v493, %v748
    %s752 = scalar_lea.vmem [#allocation3], 16
    %753 = vst.msk [vmem:[%s752] sm:$0xff] %vm87, %v750
    %754 = vst.msk [vmem:[%s752 + $0x8] sm:$0xff] %vm87, %v751
    %v755 = vpack.c.bf16 %v750, %v750
    %v756 = vpack.c.bf16 %v751, %v751
    %757 = vst.msk [vmem:[#allocation2] sm:$0xf] %vm218, %v755
    %758 = vst.msk [vmem:[#allocation2 + $0x4] sm:$0xf] %vm218, %v756
    %v761 = vunpack.c.l.b16 %v755
    %v762 = vunpack.c.l.b16 %v756
    %v763 = vpack.c.b16 %v762, %v761
    %v765 = vsel %vm87, %v763, 0
    %767 = vmatpush.bf16.msra.mxu0 0
    %768 = vmatpush.bf16.msra.mxu0 0
    %769 = vmatpush.bf16.msra.mxu0 0
    %770 = vmatpush.bf16.msra.mxu0 0
    %771 = vmatpush.bf16.msra.mxu0 0
    %772 = vmatpush.bf16.msra.mxu0 0
    %773 = vmatpush.bf16.msra.mxu0 %v84
    %774 = vmatpush.bf16.msra.mxu0 %v83
    %775 = vmatmul.bf16.gmra.mxu0 %v765
    %v776 = vpop.f32.mrf.mxu0
    %v777 = vadd.f32 0.0, %v776
    %v778 = vpop.f32.mrf.mxu0
    %v779 = vadd.f32 0.0, %v778
    %780 = vdwg.mxu0
    %v781 = vpack.c.bf16 %v779, %v777
    %782 = vmatpush.bf16.msra.mxu0 0
    %783 = vmatpush.bf16.msra.mxu0 0
    %784 = vmatpush.bf16.msra.mxu0 0
    %785 = vmatpush.bf16.msra.mxu0 0
    %786 = vmatpush.bf16.msra.mxu0 0
    %787 = vmatpush.bf16.msra.mxu0 0
    %788 = vmatpush.bf16.msra.mxu0 0
    %789 = vmatpush.bf16.msra.mxu0 %v781
    %790 = vmatmul.bf16.gmra.mxu0 %v524
    %v791 = vpop.f32.mrf.mxu0
    %v792 = vadd.f32 0.0, %v791
    %v793 = vpop.f32.mrf.mxu0
    %v794 = vadd.f32 0.0, %v793
    %795 = vdwg.mxu0
    %v796 = vmax.f32 %v792, 0.0
    %v797 = vmax.f32 %v794, 0.0
    %v798 = vpack.c.bf16 %v797, %v796
    %v800 = vsel %vm87, %v798, 0
    %802 = vmatpush.bf16.msra.mxu0 0
    %803 = vmatpush.bf16.msra.mxu0 0
    %804 = vmatpush.bf16.msra.mxu0 0
    %805 = vmatpush.bf16.msra.mxu0 0
    %806 = vmatpush.bf16.msra.mxu0 0
    %807 = vmatpush.bf16.msra.mxu0 0
    %808 = vmatpush.bf16.msra.mxu0 %v165
    %809 = vmatpush.bf16.msra.mxu0 %v164
    %810 = vmatmul.bf16.gmra.mxu0 %v800
    %v811 = vpop.f32.mrf.mxu0
    %v812 = vadd.f32 0.0, %v811
    %v813 = vpop.f32.mrf.mxu0
    %v814 = vadd.f32 0.0, %v813
    %815 = vdwg.mxu0
    %v816 = vpack.c.bf16 %v814, %v812
    %817 = vmatpush.bf16.msra.mxu0 0
    %818 = vmatpush.bf16.msra.mxu0 0
    %819 = vmatpush.bf16.msra.mxu0 0
    %820 = vmatpush.bf16.msra.mxu0 0
    %821 = vmatpush.bf16.msra.mxu0 0
    %822 = vmatpush.bf16.msra.mxu0 0
    %823 = vmatpush.bf16.msra.mxu0 0
    %824 = vmatpush.bf16.msra.mxu0 %v816
    %825 = vmatmul.bf16.gmra.mxu0 %v524
    %v826 = vpop.f32.mrf.mxu0
    %v827 = vadd.f32 0.0, %v826
    %v828 = vpop.f32.mrf.mxu0
    %v829 = vadd.f32 0.0, %v828
    %830 = vdwg.mxu0
    %v831 = vmax.f32 %v827, 0.0
    %v832 = vmax.f32 %v829, 0.0
    %v833 = vpack.c.bf16 %v831, %v831
    %v834 = vpack.c.bf16 %v832, %v832
    %837 = vrot.lane.b32.xlu0 %v833, 32
    %v838 = vpop.permute.xlu0 %837
    %839 = vrot.lane.b32.xlu0 %v834, 32
    %v840 = vpop.permute.xlu0 %839
    %843 = vst.msk [vmem:[#allocation2] sm:$0xf] %vm243, %v838
    %844 = vst.msk [vmem:[#allocation2 + $0x4] sm:$0xf] %vm243, %v840
    %v845 = vld [vmem:[#allocation2] sm:$0xf]
    %v846 = vld [vmem:[#allocation2 + $0x4] sm:$0xf]
    %v849 = vunpack.c.l.b16 %v845
    %v850 = vunpack.c.l.b16 %v846
    %v851 = vpack.c.b16 %v850, %v849
    %v853 = vsel %vm286, %v851, 0
    %855 = vmatpush.bf16.msra.mxu0 0
    %856 = vmatpush.bf16.msra.mxu0 0
    %857 = vmatpush.bf16.msra.mxu0 0
    %858 = vmatpush.bf16.msra.mxu0 0
    %859 = vmatpush.bf16.msra.mxu0 %v281
    %860 = vmatpush.bf16.msra.mxu0 %v280
    %861 = vmatpush.bf16.msra.mxu0 %v279
    %862 = vmatpush.bf16.msra.mxu0 %v278
    %863 = vmatmul.bf16.gmra.mxu0 %v853
    %v864 = vpop.f32.mrf.mxu0
    %v865 = vadd.f32 %v55, %v864
    %v866 = vpop.f32.mrf.mxu0
    %v867 = vadd.f32 %v55, %v866
    %868 = vdwg.mxu0
    %v869 = vxor.u32 %v865, 2147483648
    %v870 = vxor.u32 %v867, 2147483648
    %v871 = vmul.f32 %v869, 1.442695
    %v872 = vpow.pop %v871
    %v873 = vmul.f32 %v870, 1.442695
    %v874 = vpow.pop %v873
    %v875 = vadd.f32 %v872, 1.0
    %v876 = vadd.f32 %v874, 1.0
    %v877 = vrcp.pop %v875
    %v878 = vmul.f32 %v875, %v877
    %v879 = vsub.f32 1.0, %v878
    %v880 = vmul.f32 %v877, %v879
    %v881 = vadd.f32 %v877, %v880
    %vm882 = vweird.f32 %v875
    %vm883 = vweird.f32 %v877
    %vm884 = vmor %vm882, %vm883
    %v885 = vsel %vm884, %v877, %v881
    %v886 = vand.u32 2147483647, %v875
    %vm887 = vcmp.eq.f32.partialorder %v886, 8.507059e+37
    %v888 = vand.u32 %v875, 2147483648
    %v889 = vor.u32 1.1754944e-38, %v888
    %v890 = vsel %vm887, %v889, %v885
    %v891 = vmul.f32 1.0, %v890
    %v892 = vrcp.pop %v876
    %v893 = vmul.f32 %v876, %v892
    %v894 = vsub.f32 1.0, %v893
    %v895 = vmul.f32 %v892, %v894
    %v896 = vadd.f32 %v892, %v895
    %vm897 = vweird.f32 %v876
    %vm898 = vweird.f32 %v892
    %vm899 = vmor %vm897, %vm898
    %v900 = vsel %vm899, %v892, %v896
    %v901 = vand.u32 2147483647, %v876
    %vm902 = vcmp.eq.f32.partialorder %v901, 8.507059e+37
    %v903 = vand.u32 %v876, 2147483648
    %v904 = vor.u32 1.1754944e-38, %v903
    %v905 = vsel %vm902, %v904, %v900
    %v906 = vmul.f32 1.0, %v905
    %909 = vrot.lane.b32.xlu0 %v865, 32
    %v910 = vpop.permute.xlu0 %909
    %911 = vrot.lane.b32.xlu0 %v867, 32
    %v912 = vpop.permute.xlu0 %911
    %v915 = vmul.f32 %v891, %v910
    %v916 = vmul.f32 %v906, %v912
    %919 = vrot.lane.b32.xlu0 %v915, 64
    %v920 = vpop.permute.xlu0 %919
    %921 = vrot.lane.b32.xlu0 %v916, 64
    %v922 = vpop.permute.xlu0 %921
    %v925 = vadd.f32 %v865, %v920
    %v926 = vadd.f32 %v867, %v922
    %v927 = vtanh.pop %v925
    %v928 = vtanh.pop %v926
    %v929 = vsub.f32 1.0, %v891
    %v930 = vsub.f32 1.0, %v906
    %933 = vrot.lane.b32.xlu0 %v927, 96
    %v934 = vpop.permute.xlu0 %933
    %935 = vrot.lane.b32.xlu0 %v928, 96
    %v936 = vpop.permute.xlu0 %935
    %v939 = vmul.f32 %v929, %v934
    %v940 = vmul.f32 %v930, %v936
    %v941 = vmul.f32 %v891, %v687
    %v942 = vmul.f32 %v906, %v688
    %v943 = vadd.f32 %v939, %v941
    %v944 = vadd.f32 %v940, %v942
    %v945 = vpack.c.bf16 %v944, %v943
    %947 = vrot.lane.b32.xlu0 %v945, 96
    %v948 = vpop.permute.xlu0 %947
    %v950 = vsel %vm87, %v948, 0
    %952 = vmatpush.bf16.msra.mxu0 0
    %953 = vmatpush.bf16.msra.mxu0 0
    %954 = vmatpush.bf16.msra.mxu0 0
    %955 = vmatpush.bf16.msra.mxu0 0
    %956 = vmatpush.bf16.msra.mxu0 0
    %957 = vmatpush.bf16.msra.mxu0 0
    %958 = vmatpush.bf16.msra.mxu0 %v401
    %959 = vmatpush.bf16.msra.mxu0 %v400
    %960 = vmatmul.bf16.gmra.mxu0 %v950
    %v961 = vpop.f32.mrf.mxu0
    %v962 = vadd.f32 %v56, %v961
    %v963 = vpop.f32.mrf.mxu0
    %v964 = vadd.f32 %v56, %v963
    %965 = vdwg.mxu0
    %v966 = vmax.f32 %v962, 0.0
    %v967 = vmax.f32 %v964, 0.0
    %v968 = vpack.c.bf16 %v967, %v966
    %v970 = vsel %vm87, %v968, 0
    %972 = vmatpush.bf16.msra.mxu0 0
    %973 = vmatpush.bf16.msra.mxu0 0
    %974 = vmatpush.bf16.msra.mxu0 0
    %975 = vmatpush.bf16.msra.mxu0 0
    %976 = vmatpush.bf16.msra.mxu0 0
    %977 = vmatpush.bf16.msra.mxu0 0
    %978 = vmatpush.bf16.msra.mxu0 %v433
    %979 = vmatpush.bf16.msra.mxu0 %v432
    %980 = vmatmul.bf16.gmra.mxu0 %v970
    %v981 = vpop.f32.mrf.mxu0
    %v982 = vadd.f32 %v438, %v981
    %v983 = vpop.f32.mrf.mxu0
    %v984 = vadd.f32 %v438, %v983
    %985 = vdwg.mxu0
    %v986 = vmax.f32 %v982, 0.0
    %v987 = vmax.f32 %v984, 0.0
    %v988 = vpack.c.bf16 %v987, %v986
    %v990 = vsel %vm87, %v988, 0
    %992 = vmatpush.bf16.msra.mxu0 0
    %993 = vmatpush.bf16.msra.mxu0 0
    %994 = vmatpush.bf16.msra.mxu0 0
    %995 = vmatpush.bf16.msra.mxu0 0
    %996 = vmatpush.bf16.msra.mxu0 0
    %997 = vmatpush.bf16.msra.mxu0 0
    %998 = vmatpush.bf16.msra.mxu0 %v469
    %999 = vmatpush.bf16.msra.mxu0 %v468
    %1000 = vmatmul.bf16.gmra.mxu0 %v990
    %v1001 = vpop.f32.mrf.mxu0
    %v1002 = vadd.f32 %v473, %v1001
    %v1003 = vpop.f32.mrf.mxu0
    %v1004 = vadd.f32 %v473, %v1003
    %1005 = vdwg.mxu0
    %v1006 = vadd.f32 %v750, %v1002
    %v1007 = vadd.f32 %v751, %v1004
    %s1008 = scalar_lea.vmem [#allocation3], 32
    %1009 = vst.msk [vmem:[%s1008] sm:$0xff] %vm87, %v1006
    %1010 = vst.msk [vmem:[%s1008 + $0x8] sm:$0xff] %vm87, %v1007
    %v1011 = vpack.c.bf16 %v1006, %v1006
    %v1012 = vpack.c.bf16 %v1007, %v1007
    %1013 = vst.msk [vmem:[#allocation2] sm:$0xf] %vm218, %v1011
    %1014 = vst.msk [vmem:[#allocation2 + $0x4] sm:$0xf] %vm218, %v1012
    %v1017 = vunpack.c.l.b16 %v1011
    %v1018 = vunpack.c.l.b16 %v1012
    %v1019 = vpack.c.b16 %v1018, %v1017
    %v1021 = vsel %vm87, %v1019, 0
    %1023 = vmatpush.bf16.msra.mxu0 0
    %1024 = vmatpush.bf16.msra.mxu0 0
    %1025 = vmatpush.bf16.msra.mxu0 0
    %1026 = vmatpush.bf16.msra.mxu0 0
    %1027 = vmatpush.bf16.msra.mxu0 0
    %1028 = vmatpush.bf16.msra.mxu0 0
    %1029 = vmatpush.bf16.msra.mxu0 %v84
    %1030 = vmatpush.bf16.msra.mxu0 %v83
    %1031 = vmatmul.bf16.gmra.mxu0 %v1021
    %v1032 = vpop.f32.mrf.mxu0
    %v1033 = vadd.f32 0.0, %v1032
    %v1034 = vpop.f32.mrf.mxu0
    %v1035 = vadd.f32 0.0, %v1034
    %1036 = vdwg.mxu0
    %v1037 = vpack.c.bf16 %v1035, %v1033
    %1038 = vmatpush.bf16.msra.mxu0 0
    %1039 = vmatpush.bf16.msra.mxu0 0
    %1040 = vmatpush.bf16.msra.mxu0 0
    %1041 = vmatpush.bf16.msra.mxu0 0
    %1042 = vmatpush.bf16.msra.mxu0 0
    %1043 = vmatpush.bf16.msra.mxu0 0
    %1044 = vmatpush.bf16.msra.mxu0 0
    %1045 = vmatpush.bf16.msra.mxu0 %v1037
    %1046 = vmatmul.bf16.gmra.mxu0 %v524
    %v1047 = vpop.f32.mrf.mxu0
    %v1048 = vadd.f32 0.0, %v1047
    %v1049 = vpop.f32.mrf.mxu0
    %v1050 = vadd.f32 0.0, %v1049
    %1051 = vdwg.mxu0
    %v1052 = vmax.f32 %v1048, 0.0
    %v1053 = vmax.f32 %v1050, 0.0
    %v1054 = vpack.c.bf16 %v1053, %v1052
    %v1056 = vsel %vm87, %v1054, 0
    %1058 = vmatpush.bf16.msra.mxu0 0
    %1059 = vmatpush.bf16.msra.mxu0 0
    %1060 = vmatpush.bf16.msra.mxu0 0
    %1061 = vmatpush.bf16.msra.mxu0 0
    %1062 = vmatpush.bf16.msra.mxu0 0
    %1063 = vmatpush.bf16.msra.mxu0 0
    %1064 = vmatpush.bf16.msra.mxu0 %v165
    %1065 = vmatpush.bf16.msra.mxu0 %v164
    %1066 = vmatmul.bf16.gmra.mxu0 %v1056
    %v1067 = vpop.f32.mrf.mxu0
    %v1068 = vadd.f32 0.0, %v1067
    %v1069 = vpop.f32.mrf.mxu0
    %v1070 = vadd.f32 0.0, %v1069
    %1071 = vdwg.mxu0
    %v1072 = vpack.c.bf16 %v1070, %v1068
    %1073 = vmatpush.bf16.msra.mxu0 0
    %1074 = vmatpush.bf16.msra.mxu0 0
    %1075 = vmatpush.bf16.msra.mxu0 0
    %1076 = vmatpush.bf16.msra.mxu0 0
    %1077 = vmatpush.bf16.msra.mxu0 0
    %1078 = vmatpush.bf16.msra.mxu0 0
    %1079 = vmatpush.bf16.msra.mxu0 0
    %1080 = vmatpush.bf16.msra.mxu0 %v1072
    %1081 = vmatmul.bf16.gmra.mxu0 %v524
    %v1082 = vpop.f32.mrf.mxu0
    %v1083 = vadd.f32 0.0, %v1082
    %v1084 = vpop.f32.mrf.mxu0
    %v1085 = vadd.f32 0.0, %v1084
    %1086 = vdwg.mxu0
    %v1087 = vmax.f32 %v1083, 0.0
    %v1088 = vmax.f32 %v1085, 0.0
    %v1089 = vpack.c.bf16 %v1087, %v1087
    %v1090 = vpack.c.bf16 %v1088, %v1088
    %1093 = vrot.lane.b32.xlu0 %v1089, 32
    %v1094 = vpop.permute.xlu0 %1093
    %1095 = vrot.lane.b32.xlu0 %v1090, 32
    %v1096 = vpop.permute.xlu0 %1095
    %1099 = vst.msk [vmem:[#allocation2] sm:$0xf] %vm243, %v1094
    %1100 = vst.msk [vmem:[#allocation2 + $0x4] sm:$0xf] %vm243, %v1096
    %v1101 = vld [vmem:[#allocation2] sm:$0xf]
    %v1102 = vld [vmem:[#allocation2 + $0x4] sm:$0xf]
    %v1105 = vunpack.c.l.b16 %v1101
    %v1106 = vunpack.c.l.b16 %v1102
    %v1107 = vpack.c.b16 %v1106, %v1105
    %v1109 = vsel %vm286, %v1107, 0
    %1111 = vmatpush.bf16.msra.mxu0 0
    %1112 = vmatpush.bf16.msra.mxu0 0
    %1113 = vmatpush.bf16.msra.mxu0 0
    %1114 = vmatpush.bf16.msra.mxu0 0
    %1115 = vmatpush.bf16.msra.mxu0 %v281
    %1116 = vmatpush.bf16.msra.mxu0 %v280
    %1117 = vmatpush.bf16.msra.mxu0 %v279
    %1118 = vmatpush.bf16.msra.mxu0 %v278
    %1119 = vmatmul.bf16.gmra.mxu0 %v1109
    %v1120 = vpop.f32.mrf.mxu0
    %v1121 = vadd.f32 %v55, %v1120
    %v1122 = vpop.f32.mrf.mxu0
    %v1123 = vadd.f32 %v55, %v1122
    %1124 = vdwg.mxu0
    %v1125 = vxor.u32 %v1121, 2147483648
    %v1126 = vxor.u32 %v1123, 2147483648
    %v1127 = vmul.f32 %v1125, 1.442695
    %v1128 = vpow.pop %v1127
    %v1129 = vmul.f32 %v1126, 1.442695
    %v1130 = vpow.pop %v1129
    %v1131 = vadd.f32 %v1128, 1.0
    %v1132 = vadd.f32 %v1130, 1.0
    %v1133 = vrcp.pop %v1131
    %v1134 = vmul.f32 %v1131, %v1133
    %v1135 = vsub.f32 1.0, %v1134
    %v1136 = vmul.f32 %v1133, %v1135
    %v1137 = vadd.f32 %v1133, %v1136
    %vm1138 = vweird.f32 %v1131
    %vm1139 = vweird.f32 %v1133
    %vm1140 = vmor %vm1138, %vm1139
    %v1141 = vsel %vm1140, %v1133, %v1137
    %v1142 = vand.u32 2147483647, %v1131
    %vm1143 = vcmp.eq.f32.partialorder %v1142, 8.507059e+37
    %v1144 = vand.u32 %v1131, 2147483648
    %v1145 = vor.u32 1.1754944e-38, %v1144
    %v1146 = vsel %vm1143, %v1145, %v1141
    %v1147 = vmul.f32 1.0, %v1146
    %v1148 = vrcp.pop %v1132
    %v1149 = vmul.f32 %v1132, %v1148
    %v1150 = vsub.f32 1.0, %v1149
    %v1151 = vmul.f32 %v1148, %v1150
    %v1152 = vadd.f32 %v1148, %v1151
    %vm1153 = vweird.f32 %v1132
    %vm1154 = vweird.f32 %v1148
    %vm1155 = vmor %vm1153, %vm1154
    %v1156 = vsel %vm1155, %v1148, %v1152
    %v1157 = vand.u32 2147483647, %v1132
    %vm1158 = vcmp.eq.f32.partialorder %v1157, 8.507059e+37
    %v1159 = vand.u32 %v1132, 2147483648
    %v1160 = vor.u32 1.1754944e-38, %v1159
    %v1161 = vsel %vm1158, %v1160, %v1156
    %v1162 = vmul.f32 1.0, %v1161
    %1165 = vrot.lane.b32.xlu0 %v1121, 32
    %v1166 = vpop.permute.xlu0 %1165
    %1167 = vrot.lane.b32.xlu0 %v1123, 32
    %v1168 = vpop.permute.xlu0 %1167
    %v1171 = vmul.f32 %v1147, %v1166
    %v1172 = vmul.f32 %v1162, %v1168
    %1175 = vrot.lane.b32.xlu0 %v1171, 64
    %v1176 = vpop.permute.xlu0 %1175
    %1177 = vrot.lane.b32.xlu0 %v1172, 64
    %v1178 = vpop.permute.xlu0 %1177
    %v1181 = vadd.f32 %v1121, %v1176
    %v1182 = vadd.f32 %v1123, %v1178
    %v1183 = vtanh.pop %v1181
    %v1184 = vtanh.pop %v1182
    %v1185 = vsub.f32 1.0, %v1147
    %v1186 = vsub.f32 1.0, %v1162
    %1189 = vrot.lane.b32.xlu0 %v1183, 96
    %v1190 = vpop.permute.xlu0 %1189
    %1191 = vrot.lane.b32.xlu0 %v1184, 96
    %v1192 = vpop.permute.xlu0 %1191
    %v1195 = vmul.f32 %v1185, %v1190
    %v1196 = vmul.f32 %v1186, %v1192
    %v1197 = vmul.f32 %v1147, %v943
    %v1198 = vmul.f32 %v1162, %v944
    %v1199 = vadd.f32 %v1195, %v1197
    %v1200 = vadd.f32 %v1196, %v1198
    %v1201 = vpack.c.bf16 %v1200, %v1199
    %1203 = vrot.lane.b32.xlu0 %v1201, 96
    %v1204 = vpop.permute.xlu0 %1203
    %v1206 = vsel %vm87, %v1204, 0
    %1208 = vmatpush.bf16.msra.mxu0 0
    %1209 = vmatpush.bf16.msra.mxu0 0
    %1210 = vmatpush.bf16.msra.mxu0 0
    %1211 = vmatpush.bf16.msra.mxu0 0
    %1212 = vmatpush.bf16.msra.mxu0 0
    %1213 = vmatpush.bf16.msra.mxu0 0
    %1214 = vmatpush.bf16.msra.mxu0 %v401
    %1215 = vmatpush.bf16.msra.mxu0 %v400
    %1216 = vmatmul.bf16.gmra.mxu0 %v1206
    %v1217 = vpop.f32.mrf.mxu0
    %v1218 = vadd.f32 %v56, %v1217
    %v1219 = vpop.f32.mrf.mxu0
    %v1220 = vadd.f32 %v56, %v1219
    %1221 = vdwg.mxu0
    %v1222 = vmax.f32 %v1218, 0.0
    %v1223 = vmax.f32 %v1220, 0.0
    %v1224 = vpack.c.bf16 %v1223, %v1222
    %v1226 = vsel %vm87, %v1224, 0
    %1228 = vmatpush.bf16.msra.mxu0 0
    %1229 = vmatpush.bf16.msra.mxu0 0
    %1230 = vmatpush.bf16.msra.mxu0 0
    %1231 = vmatpush.bf16.msra.mxu0 0
    %1232 = vmatpush.bf16.msra.mxu0 0
    %1233 = vmatpush.bf16.msra.mxu0 0
    %1234 = vmatpush.bf16.msra.mxu0 %v433
    %1235 = vmatpush.bf16.msra.mxu0 %v432
    %1236 = vmatmul.bf16.gmra.mxu0 %v1226
    %v1237 = vpop.f32.mrf.mxu0
    %v1238 = vadd.f32 %v438, %v1237
    %v1239 = vpop.f32.mrf.mxu0
    %v1240 = vadd.f32 %v438, %v1239
    %1241 = vdwg.mxu0
    %v1242 = vmax.f32 %v1238, 0.0
    %v1243 = vmax.f32 %v1240, 0.0
    %v1244 = vpack.c.bf16 %v1243, %v1242
    %v1246 = vsel %vm87, %v1244, 0
    %1248 = vmatpush.bf16.msra.mxu0 0
    %1249 = vmatpush.bf16.msra.mxu0 0
    %1250 = vmatpush.bf16.msra.mxu0 0
    %1251 = vmatpush.bf16.msra.mxu0 0
    %1252 = vmatpush.bf16.msra.mxu0 0
    %1253 = vmatpush.bf16.msra.mxu0 0
    %1254 = vmatpush.bf16.msra.mxu0 %v469
    %1255 = vmatpush.bf16.msra.mxu0 %v468
    %1256 = vmatmul.bf16.gmra.mxu0 %v1246
    %v1257 = vpop.f32.mrf.mxu0
    %v1258 = vadd.f32 %v473, %v1257
    %v1259 = vpop.f32.mrf.mxu0
    %v1260 = vadd.f32 %v473, %v1259
    %1261 = vdwg.mxu0
    %v1262 = vadd.f32 %v1006, %v1258
    %v1263 = vadd.f32 %v1007, %v1260
    %s1264 = scalar_lea.vmem [#allocation3], 48
    %1265 = vst.msk [vmem:[%s1264] sm:$0xff] %vm87, %v1262
    %1266 = vst.msk [vmem:[%s1264 + $0x8] sm:$0xff] %vm87, %v1263
    %v1267 = vxor.u32 %v308, 2147483648
    %v1268 = vxor.u32 %v310, 2147483648
    %v1269 = vmul.f32 %v1267, 1.442695
    %v1270 = vpow.pop %v1269
    %v1271 = vmul.f32 %v1268, 1.442695
    %v1272 = vpow.pop %v1271
    %v1273 = vadd.f32 %v1270, 1.0
    %v1274 = vadd.f32 %v1272, 1.0
    %v1275 = vrcp.pop %v1273
    %v1276 = vmul.f32 %v1273, %v1275
    %v1277 = vsub.f32 1.0, %v1276
    %v1278 = vmul.f32 %v1275, %v1277
    %v1279 = vadd.f32 %v1275, %v1278
    %vm1280 = vweird.f32 %v1273
    %vm1281 = vweird.f32 %v1275
    %vm1282 = vmor %vm1280, %vm1281
    %v1283 = vsel %vm1282, %v1275, %v1279
    %v1284 = vand.u32 2147483647, %v1273
    %vm1285 = vcmp.eq.f32.partialorder %v1284, 8.507059e+37
    %v1286 = vand.u32 %v1273, 2147483648
    %v1287 = vor.u32 1.1754944e-38, %v1286
    %v1288 = vsel %vm1285, %v1287, %v1283
    %v1289 = vmul.f32 1.0, %v1288
    %v1290 = vrcp.pop %v1274
    %v1291 = vmul.f32 %v1274, %v1290
    %v1292 = vsub.f32 1.0, %v1291
    %v1293 = vmul.f32 %v1290, %v1292
    %v1294 = vadd.f32 %v1290, %v1293
    %vm1295 = vweird.f32 %v1274
    %vm1296 = vweird.f32 %v1290
    %vm1297 = vmor %vm1295, %vm1296
    %v1298 = vsel %vm1297, %v1290, %v1294
    %v1299 = vand.u32 2147483647, %v1274
    %vm1300 = vcmp.eq.f32.partialorder %v1299, 8.507059e+37
    %v1301 = vand.u32 %v1274, 2147483648
    %v1302 = vor.u32 1.1754944e-38, %v1301
    %v1303 = vsel %vm1300, %v1302, %v1298
    %v1304 = vmul.f32 1.0, %v1303
    %1307 = vrot.lane.b32.xlu0 %v308, 32
    %v1308 = vpop.permute.xlu0 %1307
    %1309 = vrot.lane.b32.xlu0 %v310, 32
    %v1310 = vpop.permute.xlu0 %1309
    %v1313 = vmul.f32 %v1289, %v1308
    %v1314 = vmul.f32 %v1304, %v1310
    %1317 = vrot.lane.b32.xlu0 %v1313, 64
    %v1318 = vpop.permute.xlu0 %1317
    %1319 = vrot.lane.b32.xlu0 %v1314, 64
    %v1320 = vpop.permute.xlu0 %1319
    %v1323 = vadd.f32 %v308, %v1318
    %v1324 = vadd.f32 %v310, %v1320
    %v1325 = vtanh.pop %v1323
    %v1326 = vtanh.pop %v1324
    %v1327 = vsub.f32 1.0, %v1289
    %v1328 = vsub.f32 1.0, %v1304
    %1331 = vrot.lane.b32.xlu0 %v1325, 96
    %v1332 = vpop.permute.xlu0 %1331
    %1333 = vrot.lane.b32.xlu0 %v1326, 96
    %v1334 = vpop.permute.xlu0 %1333
    %v1337 = vmul.f32 %v1327, %v1332
    %v1338 = vmul.f32 %v1328, %v1334
    %v1339 = vmul.f32 %v1289, %v1199
    %v1340 = vmul.f32 %v1304, %v1200
    %v1341 = vadd.f32 %v1337, %v1339
    %v1342 = vadd.f32 %v1338, %v1340
    %v1343 = vpack.c.bf16 %v1342, %v1341
    %1345 = vrot.lane.b32.xlu0 %v1343, 96
    %v1346 = vpop.permute.xlu0 %1345
    %v1348 = vsel %vm87, %v1346, 0
    %1350 = vmatpush.bf16.msra.mxu0 0
    %1351 = vmatpush.bf16.msra.mxu0 0
    %1352 = vmatpush.bf16.msra.mxu0 0
    %1353 = vmatpush.bf16.msra.mxu0 0
    %1354 = vmatpush.bf16.msra.mxu0 0
    %1355 = vmatpush.bf16.msra.mxu0 0
    %1356 = vmatpush.bf16.msra.mxu0 %v401
    %1357 = vmatpush.bf16.msra.mxu0 %v400
    %1358 = vmatmul.bf16.gmra.mxu0 %v1348
    %v1359 = vpop.f32.mrf.mxu0
    %v1360 = vadd.f32 %v56, %v1359
    %v1361 = vpop.f32.mrf.mxu0
    %v1362 = vadd.f32 %v56, %v1361
    %1363 = vdwg.mxu0
    %v1364 = vmax.f32 %v1360, 0.0
    %v1365 = vmax.f32 %v1362, 0.0
    %v1366 = vpack.c.bf16 %v1365, %v1364
    %v1368 = vsel %vm87, %v1366, 0
    %1370 = vmatpush.bf16.msra.mxu0 0
    %1371 = vmatpush.bf16.msra.mxu0 0
    %1372 = vmatpush.bf16.msra.mxu0 0
    %1373 = vmatpush.bf16.msra.mxu0 0
    %1374 = vmatpush.bf16.msra.mxu0 0
    %1375 = vmatpush.bf16.msra.mxu0 0
    %1376 = vmatpush.bf16.msra.mxu0 %v433
    %1377 = vmatpush.bf16.msra.mxu0 %v432
    %1378 = vmatmul.bf16.gmra.mxu0 %v1368
    %v1379 = vpop.f32.mrf.mxu0
    %v1380 = vadd.f32 %v438, %v1379
    %v1381 = vpop.f32.mrf.mxu0
    %v1382 = vadd.f32 %v438, %v1381
    %1383 = vdwg.mxu0
    %v1384 = vmax.f32 %v1380, 0.0
    %v1385 = vmax.f32 %v1382, 0.0
    %v1386 = vpack.c.bf16 %v1385, %v1384
    %v1388 = vsel %vm87, %v1386, 0
    %1390 = vmatpush.bf16.msra.mxu0 0
    %1391 = vmatpush.bf16.msra.mxu0 0
    %1392 = vmatpush.bf16.msra.mxu0 0
    %1393 = vmatpush.bf16.msra.mxu0 0
    %1394 = vmatpush.bf16.msra.mxu0 0
    %1395 = vmatpush.bf16.msra.mxu0 0
    %1396 = vmatpush.bf16.msra.mxu0 %v469
    %1397 = vmatpush.bf16.msra.mxu0 %v468
    %1398 = vmatmul.bf16.gmra.mxu0 %v1388
    %v1399 = vpop.f32.mrf.mxu0
    %v1400 = vadd.f32 %v473, %v1399
    %v1401 = vpop.f32.mrf.mxu0
    %v1402 = vadd.f32 %v473, %v1401
    %1403 = vdwg.mxu0
    %v1404 = vadd.f32 %v59, %v1400
    %v1405 = vadd.f32 %v60, %v1402
    %s1406 = scalar_lea.vmem [#allocation3], 64
    %1407 = vst.msk [vmem:[%s1406] sm:$0xff] %vm87, %v1404
    %1408 = vst.msk [vmem:[%s1406 + $0x8] sm:$0xff] %vm87, %v1405
    %v1409 = vpack.c.bf16 %v1404, %v1404
    %v1410 = vpack.c.bf16 %v1405, %v1405
    %1411 = vst.msk [vmem:[#allocation2] sm:$0xf] %vm218, %v1409
    %1412 = vst.msk [vmem:[#allocation2 + $0x4] sm:$0xf] %vm218, %v1410
    %v1415 = vunpack.c.l.b16 %v1409
    %v1416 = vunpack.c.l.b16 %v1410
    %v1417 = vpack.c.b16 %v1416, %v1415
    %v1419 = vsel %vm87, %v1417, 0
    %1421 = vmatpush.bf16.msra.mxu0 0
    %1422 = vmatpush.bf16.msra.mxu0 0
    %1423 = vmatpush.bf16.msra.mxu0 0
    %1424 = vmatpush.bf16.msra.mxu0 0
    %1425 = vmatpush.bf16.msra.mxu0 0
    %1426 = vmatpush.bf16.msra.mxu0 0
    %1427 = vmatpush.bf16.msra.mxu0 %v84
    %1428 = vmatpush.bf16.msra.mxu0 %v83
    %1429 = vmatmul.bf16.gmra.mxu0 %v1419
    %v1430 = vpop.f32.mrf.mxu0
    %v1431 = vadd.f32 0.0, %v1430
    %v1432 = vpop.f32.mrf.mxu0
    %v1433 = vadd.f32 0.0, %v1432
    %1434 = vdwg.mxu0
    %v1435 = vpack.c.bf16 %v1433, %v1431
    %1436 = vmatpush.bf16.msra.mxu0 0
    %1437 = vmatpush.bf16.msra.mxu0 0
    %1438 = vmatpush.bf16.msra.mxu0 0
    %1439 = vmatpush.bf16.msra.mxu0 0
    %1440 = vmatpush.bf16.msra.mxu0 0
    %1441 = vmatpush.bf16.msra.mxu0 0
    %1442 = vmatpush.bf16.msra.mxu0 0
    %1443 = vmatpush.bf16.msra.mxu0 %v1435
    %1444 = vmatmul.bf16.gmra.mxu0 %v524
    %v1445 = vpop.f32.mrf.mxu0
    %v1446 = vadd.f32 0.0, %v1445
    %v1447 = vpop.f32.mrf.mxu0
    %v1448 = vadd.f32 0.0, %v1447
    %1449 = vdwg.mxu0
    %v1450 = vmax.f32 %v1446, 0.0
    %v1451 = vmax.f32 %v1448, 0.0
    %v1452 = vpack.c.bf16 %v1451, %v1450
    %v1454 = vsel %vm87, %v1452, 0
    %1456 = vmatpush.bf16.msra.mxu0 0
    %1457 = vmatpush.bf16.msra.mxu0 0
    %1458 = vmatpush.bf16.msra.mxu0 0
    %1459 = vmatpush.bf16.msra.mxu0 0
    %1460 = vmatpush.bf16.msra.mxu0 0
    %1461 = vmatpush.bf16.msra.mxu0 0
    %1462 = vmatpush.bf16.msra.mxu0 %v165
    %1463 = vmatpush.bf16.msra.mxu0 %v164
    %1464 = vmatmul.bf16.gmra.mxu0 %v1454
    %v1465 = vpop.f32.mrf.mxu0
    %v1466 = vadd.f32 0.0, %v1465
    %v1467 = vpop.f32.mrf.mxu0
    %v1468 = vadd.f32 0.0, %v1467
    %1469 = vdwg.mxu0
    %v1470 = vpack.c.bf16 %v1468, %v1466
    %1471 = vmatpush.bf16.msra.mxu0 0
    %1472 = vmatpush.bf16.msra.mxu0 0
    %1473 = vmatpush.bf16.msra.mxu0 0
    %1474 = vmatpush.bf16.msra.mxu0 0
    %1475 = vmatpush.bf16.msra.mxu0 0
    %1476 = vmatpush.bf16.msra.mxu0 0
    %1477 = vmatpush.bf16.msra.mxu0 0
    %1478 = vmatpush.bf16.msra.mxu0 %v1470
    %1479 = vmatmul.bf16.gmra.mxu0 %v524
    %v1480 = vpop.f32.mrf.mxu0
    %v1481 = vadd.f32 0.0, %v1480
    %v1482 = vpop.f32.mrf.mxu0
    %v1483 = vadd.f32 0.0, %v1482
    %1484 = vdwg.mxu0
    %v1485 = vmax.f32 %v1481, 0.0
    %v1486 = vmax.f32 %v1483, 0.0
    %v1487 = vpack.c.bf16 %v1485, %v1485
    %v1488 = vpack.c.bf16 %v1486, %v1486
    %1491 = vrot.lane.b32.xlu0 %v1487, 32
    %v1492 = vpop.permute.xlu0 %1491
    %1493 = vrot.lane.b32.xlu0 %v1488, 32
    %v1494 = vpop.permute.xlu0 %1493
    %1497 = vst.msk [vmem:[#allocation2] sm:$0xf] %vm243, %v1492
    %1498 = vst.msk [vmem:[#allocation2 + $0x4] sm:$0xf] %vm243, %v1494
    %v1499 = vld [vmem:[#allocation2] sm:$0xf]
    %v1500 = vld [vmem:[#allocation2 + $0x4] sm:$0xf]
    %v1503 = vunpack.c.l.b16 %v1499
    %v1504 = vunpack.c.l.b16 %v1500
    %v1505 = vpack.c.b16 %v1504, %v1503
    %v1507 = vsel %vm286, %v1505, 0
    %1509 = vmatpush.bf16.msra.mxu0 0
    %1510 = vmatpush.bf16.msra.mxu0 0
    %1511 = vmatpush.bf16.msra.mxu0 0
    %1512 = vmatpush.bf16.msra.mxu0 0
    %1513 = vmatpush.bf16.msra.mxu0 %v281
    %1514 = vmatpush.bf16.msra.mxu0 %v280
    %1515 = vmatpush.bf16.msra.mxu0 %v279
    %1516 = vmatpush.bf16.msra.mxu0 %v278
    %1517 = vmatmul.bf16.gmra.mxu0 %v1507
    %v1518 = vpop.f32.mrf.mxu0
    %v1519 = vadd.f32 %v55, %v1518
    %v1520 = vpop.f32.mrf.mxu0
    %v1521 = vadd.f32 %v55, %v1520
    %1522 = vdwg.mxu0
    %v1523 = vxor.u32 %v1519, 2147483648
    %v1524 = vxor.u32 %v1521, 2147483648
    %v1525 = vmul.f32 %v1523, 1.442695
    %v1526 = vpow.pop %v1525
    %v1527 = vmul.f32 %v1524, 1.442695
    %v1528 = vpow.pop %v1527
    %v1529 = vadd.f32 %v1526, 1.0
    %v1530 = vadd.f32 %v1528, 1.0
    %v1531 = vrcp.pop %v1529
    %v1532 = vmul.f32 %v1529, %v1531
    %v1533 = vsub.f32 1.0, %v1532
    %v1534 = vmul.f32 %v1531, %v1533
    %v1535 = vadd.f32 %v1531, %v1534
    %vm1536 = vweird.f32 %v1529
    %vm1537 = vweird.f32 %v1531
    %vm1538 = vmor %vm1536, %vm1537
    %v1539 = vsel %vm1538, %v1531, %v1535
    %v1540 = vand.u32 2147483647, %v1529
    %vm1541 = vcmp.eq.f32.partialorder %v1540, 8.507059e+37
    %v1542 = vand.u32 %v1529, 2147483648
    %v1543 = vor.u32 1.1754944e-38, %v1542
    %v1544 = vsel %vm1541, %v1543, %v1539
    %v1545 = vmul.f32 1.0, %v1544
    %v1546 = vrcp.pop %v1530
    %v1547 = vmul.f32 %v1530, %v1546
    %v1548 = vsub.f32 1.0, %v1547
    %v1549 = vmul.f32 %v1546, %v1548
    %v1550 = vadd.f32 %v1546, %v1549
    %vm1551 = vweird.f32 %v1530
    %vm1552 = vweird.f32 %v1546
    %vm1553 = vmor %vm1551, %vm1552
    %v1554 = vsel %vm1553, %v1546, %v1550
    %v1555 = vand.u32 2147483647, %v1530
    %vm1556 = vcmp.eq.f32.partialorder %v1555, 8.507059e+37
    %v1557 = vand.u32 %v1530, 2147483648
    %v1558 = vor.u32 1.1754944e-38, %v1557
    %v1559 = vsel %vm1556, %v1558, %v1554
    %v1560 = vmul.f32 1.0, %v1559
    %1563 = vrot.lane.b32.xlu0 %v1519, 32
    %v1564 = vpop.permute.xlu0 %1563
    %1565 = vrot.lane.b32.xlu0 %v1521, 32
    %v1566 = vpop.permute.xlu0 %1565
    %v1569 = vmul.f32 %v1545, %v1564
    %v1570 = vmul.f32 %v1560, %v1566
    %1573 = vrot.lane.b32.xlu0 %v1569, 64
    %v1574 = vpop.permute.xlu0 %1573
    %1575 = vrot.lane.b32.xlu0 %v1570, 64
    %v1576 = vpop.permute.xlu0 %1575
    %v1579 = vadd.f32 %v1519, %v1574
    %v1580 = vadd.f32 %v1521, %v1576
    %v1581 = vtanh.pop %v1579
    %v1582 = vtanh.pop %v1580
    %v1583 = vsub.f32 1.0, %v1545
    %v1584 = vsub.f32 1.0, %v1560
    %1587 = vrot.lane.b32.xlu0 %v1581, 96
    %v1588 = vpop.permute.xlu0 %1587
    %1589 = vrot.lane.b32.xlu0 %v1582, 96
    %v1590 = vpop.permute.xlu0 %1589
    %v1593 = vmul.f32 %v1583, %v1588
    %v1594 = vmul.f32 %v1584, %v1590
    %v1595 = vmul.f32 %v1545, %v1341
    %v1596 = vmul.f32 %v1560, %v1342
    %v1597 = vadd.f32 %v1593, %v1595
    %v1598 = vadd.f32 %v1594, %v1596
    %v1599 = vpack.c.bf16 %v1598, %v1597
    %1601 = vrot.lane.b32.xlu0 %v1599, 96
    %v1602 = vpop.permute.xlu0 %1601
    %v1604 = vsel %vm87, %v1602, 0
    %1606 = vmatpush.bf16.msra.mxu0 0
    %1607 = vmatpush.bf16.msra.mxu0 0
    %1608 = vmatpush.bf16.msra.mxu0 0
    %1609 = vmatpush.bf16.msra.mxu0 0
    %1610 = vmatpush.bf16.msra.mxu0 0
    %1611 = vmatpush.bf16.msra.mxu0 0
    %1612 = vmatpush.bf16.msra.mxu0 %v401
    %1613 = vmatpush.bf16.msra.mxu0 %v400
    %1614 = vmatmul.bf16.gmra.mxu0 %v1604
    %v1615 = vpop.f32.mrf.mxu0
    %v1616 = vadd.f32 %v56, %v1615
    %v1617 = vpop.f32.mrf.mxu0
    %v1618 = vadd.f32 %v56, %v1617
    %1619 = vdwg.mxu0
    %v1620 = vmax.f32 %v1616, 0.0
    %v1621 = vmax.f32 %v1618, 0.0
    %v1622 = vpack.c.bf16 %v1621, %v1620
    %v1624 = vsel %vm87, %v1622, 0
    %1626 = vmatpush.bf16.msra.mxu0 0
    %1627 = vmatpush.bf16.msra.mxu0 0
    %1628 = vmatpush.bf16.msra.mxu0 0
    %1629 = vmatpush.bf16.msra.mxu0 0
    %1630 = vmatpush.bf16.msra.mxu0 0
    %1631 = vmatpush.bf16.msra.mxu0 0
    %1632 = vmatpush.bf16.msra.mxu0 %v433
    %1633 = vmatpush.bf16.msra.mxu0 %v432
    %1634 = vmatmul.bf16.gmra.mxu0 %v1624
    %v1635 = vpop.f32.mrf.mxu0
    %v1636 = vadd.f32 %v438, %v1635
    %v1637 = vpop.f32.mrf.mxu0
    %v1638 = vadd.f32 %v438, %v1637
    %1639 = vdwg.mxu0
    %v1640 = vmax.f32 %v1636, 0.0
    %v1641 = vmax.f32 %v1638, 0.0
    %v1642 = vpack.c.bf16 %v1641, %v1640
    %v1644 = vsel %vm87, %v1642, 0
    %1646 = vmatpush.bf16.msra.mxu0 0
    %1647 = vmatpush.bf16.msra.mxu0 0
    %1648 = vmatpush.bf16.msra.mxu0 0
    %1649 = vmatpush.bf16.msra.mxu0 0
    %1650 = vmatpush.bf16.msra.mxu0 0
    %1651 = vmatpush.bf16.msra.mxu0 0
    %1652 = vmatpush.bf16.msra.mxu0 %v469
    %1653 = vmatpush.bf16.msra.mxu0 %v468
    %1654 = vmatmul.bf16.gmra.mxu0 %v1644
    %v1655 = vpop.f32.mrf.mxu0
    %v1656 = vadd.f32 %v473, %v1655
    %v1657 = vpop.f32.mrf.mxu0
    %v1658 = vadd.f32 %v473, %v1657
    %1659 = vdwg.mxu0
    %v1660 = vadd.f32 %v1404, %v1656
    %v1661 = vadd.f32 %v1405, %v1658
    %s1662 = scalar_lea.vmem [#allocation3], 80
    %1663 = vst.msk [vmem:[%s1662] sm:$0xff] %vm87, %v1660
    %1664 = vst.msk [vmem:[%s1662 + $0x8] sm:$0xff] %vm87, %v1661
    %v1665 = vpack.c.bf16 %v1660, %v1660
    %v1666 = vpack.c.bf16 %v1661, %v1661
    %1667 = vst.msk [vmem:[#allocation2] sm:$0xf] %vm218, %v1665
    %1668 = vst.msk [vmem:[#allocation2 + $0x4] sm:$0xf] %vm218, %v1666
    %v1671 = vunpack.c.l.b16 %v1665
    %v1672 = vunpack.c.l.b16 %v1666
    %v1673 = vpack.c.b16 %v1672, %v1671
    %v1675 = vsel %vm87, %v1673, 0
    %1677 = vmatpush.bf16.msra.mxu0 0
    %1678 = vmatpush.bf16.msra.mxu0 0
    %1679 = vmatpush.bf16.msra.mxu0 0
    %1680 = vmatpush.bf16.msra.mxu0 0
    %1681 = vmatpush.bf16.msra.mxu0 0
    %1682 = vmatpush.bf16.msra.mxu0 0
    %1683 = vmatpush.bf16.msra.mxu0 %v84
    %1684 = vmatpush.bf16.msra.mxu0 %v83
    %1685 = vmatmul.bf16.gmra.mxu0 %v1675
    %v1686 = vpop.f32.mrf.mxu0
    %v1687 = vadd.f32 0.0, %v1686
    %v1688 = vpop.f32.mrf.mxu0
    %v1689 = vadd.f32 0.0, %v1688
    %1690 = vdwg.mxu0
    %v1691 = vpack.c.bf16 %v1689, %v1687
    %1692 = vmatpush.bf16.msra.mxu0 0
    %1693 = vmatpush.bf16.msra.mxu0 0
    %1694 = vmatpush.bf16.msra.mxu0 0
    %1695 = vmatpush.bf16.msra.mxu0 0
    %1696 = vmatpush.bf16.msra.mxu0 0
    %1697 = vmatpush.bf16.msra.mxu0 0
    %1698 = vmatpush.bf16.msra.mxu0 0
    %1699 = vmatpush.bf16.msra.mxu0 %v1691
    %1700 = vmatmul.bf16.gmra.mxu0 %v524
    %v1701 = vpop.f32.mrf.mxu0
    %v1702 = vadd.f32 0.0, %v1701
    %v1703 = vpop.f32.mrf.mxu0
    %v1704 = vadd.f32 0.0, %v1703
    %1705 = vdwg.mxu0
    %v1706 = vmax.f32 %v1702, 0.0
    %v1707 = vmax.f32 %v1704, 0.0
    %v1708 = vpack.c.bf16 %v1707, %v1706
    %v1710 = vsel %vm87, %v1708, 0
    %1712 = vmatpush.bf16.msra.mxu0 0
    %1713 = vmatpush.bf16.msra.mxu0 0
    %1714 = vmatpush.bf16.msra.mxu0 0
    %1715 = vmatpush.bf16.msra.mxu0 0
    %1716 = vmatpush.bf16.msra.mxu0 0
    %1717 = vmatpush.bf16.msra.mxu0 0
    %1718 = vmatpush.bf16.msra.mxu0 %v165
    %1719 = vmatpush.bf16.msra.mxu0 %v164
    %1720 = vmatmul.bf16.gmra.mxu0 %v1710
    %v1721 = vpop.f32.mrf.mxu0
    %v1722 = vadd.f32 0.0, %v1721
    %v1723 = vpop.f32.mrf.mxu0
    %v1724 = vadd.f32 0.0, %v1723
    %1725 = vdwg.mxu0
    %v1726 = vpack.c.bf16 %v1724, %v1722
    %1727 = vmatpush.bf16.msra.mxu0 0
    %1728 = vmatpush.bf16.msra.mxu0 0
    %1729 = vmatpush.bf16.msra.mxu0 0
    %1730 = vmatpush.bf16.msra.mxu0 0
    %1731 = vmatpush.bf16.msra.mxu0 0
    %1732 = vmatpush.bf16.msra.mxu0 0
    %1733 = vmatpush.bf16.msra.mxu0 0
    %1734 = vmatpush.bf16.msra.mxu0 %v1726
    %1735 = vmatmul.bf16.gmra.mxu0 %v524
    %v1736 = vpop.f32.mrf.mxu0
    %v1737 = vadd.f32 0.0, %v1736
    %v1738 = vpop.f32.mrf.mxu0
    %v1739 = vadd.f32 0.0, %v1738
    %1740 = vdwg.mxu0
    %v1741 = vmax.f32 %v1737, 0.0
    %v1742 = vmax.f32 %v1739, 0.0
    %v1743 = vpack.c.bf16 %v1741, %v1741
    %v1744 = vpack.c.bf16 %v1742, %v1742
    %1747 = vrot.lane.b32.xlu0 %v1743, 32
    %v1748 = vpop.permute.xlu0 %1747
    %1749 = vrot.lane.b32.xlu0 %v1744, 32
    %v1750 = vpop.permute.xlu0 %1749
    %1753 = vst.msk [vmem:[#allocation2] sm:$0xf] %vm243, %v1748
    %1754 = vst.msk [vmem:[#allocation2 + $0x4] sm:$0xf] %vm243, %v1750
    %v1755 = vld [vmem:[#allocation2] sm:$0xf]
    %v1756 = vld [vmem:[#allocation2 + $0x4] sm:$0xf]
    %v1759 = vunpack.c.l.b16 %v1755
    %v1760 = vunpack.c.l.b16 %v1756
    %v1761 = vpack.c.b16 %v1760, %v1759
    %v1763 = vsel %vm286, %v1761, 0
    %1765 = vmatpush.bf16.msra.mxu0 0
    %1766 = vmatpush.bf16.msra.mxu0 0
    %1767 = vmatpush.bf16.msra.mxu0 0
    %1768 = vmatpush.bf16.msra.mxu0 0
    %1769 = vmatpush.bf16.msra.mxu0 %v281
    %1770 = vmatpush.bf16.msra.mxu0 %v280
    %1771 = vmatpush.bf16.msra.mxu0 %v279
    %1772 = vmatpush.bf16.msra.mxu0 %v278
    %1773 = vmatmul.bf16.gmra.mxu0 %v1763
    %v1774 = vpop.f32.mrf.mxu0
    %v1775 = vadd.f32 %v55, %v1774
    %v1776 = vpop.f32.mrf.mxu0
    %v1777 = vadd.f32 %v55, %v1776
    %1778 = vdwg.mxu0
    %v1779 = vxor.u32 %v1775, 2147483648
    %v1780 = vxor.u32 %v1777, 2147483648
    %v1781 = vmul.f32 %v1779, 1.442695
    %v1782 = vpow.pop %v1781
    %v1783 = vmul.f32 %v1780, 1.442695
    %v1784 = vpow.pop %v1783
    %v1785 = vadd.f32 %v1782, 1.0
    %v1786 = vadd.f32 %v1784, 1.0
    %v1787 = vrcp.pop %v1785
    %v1788 = vmul.f32 %v1785, %v1787
    %v1789 = vsub.f32 1.0, %v1788
    %v1790 = vmul.f32 %v1787, %v1789
    %v1791 = vadd.f32 %v1787, %v1790
    %vm1792 = vweird.f32 %v1785
    %vm1793 = vweird.f32 %v1787
    %vm1794 = vmor %vm1792, %vm1793
    %v1795 = vsel %vm1794, %v1787, %v1791
    %v1796 = vand.u32 2147483647, %v1785
    %vm1797 = vcmp.eq.f32.partialorder %v1796, 8.507059e+37
    %v1798 = vand.u32 %v1785, 2147483648
    %v1799 = vor.u32 1.1754944e-38, %v1798
    %v1800 = vsel %vm1797, %v1799, %v1795
    %v1801 = vmul.f32 1.0, %v1800
    %v1802 = vrcp.pop %v1786
    %v1803 = vmul.f32 %v1786, %v1802
    %v1804 = vsub.f32 1.0, %v1803
    %v1805 = vmul.f32 %v1802, %v1804
    %v1806 = vadd.f32 %v1802, %v1805
    %vm1807 = vweird.f32 %v1786
    %vm1808 = vweird.f32 %v1802
    %vm1809 = vmor %vm1807, %vm1808
    %v1810 = vsel %vm1809, %v1802, %v1806
    %v1811 = vand.u32 2147483647, %v1786
    %vm1812 = vcmp.eq.f32.partialorder %v1811, 8.507059e+37
    %v1813 = vand.u32 %v1786, 2147483648
    %v1814 = vor.u32 1.1754944e-38, %v1813
    %v1815 = vsel %vm1812, %v1814, %v1810
    %v1816 = vmul.f32 1.0, %v1815
    %1819 = vrot.lane.b32.xlu0 %v1775, 32
    %v1820 = vpop.permute.xlu0 %1819
    %1821 = vrot.lane.b32.xlu0 %v1777, 32
    %v1822 = vpop.permute.xlu0 %1821
    %v1825 = vmul.f32 %v1801, %v1820
    %v1826 = vmul.f32 %v1816, %v1822
    %1829 = vrot.lane.b32.xlu0 %v1825, 64
    %v1830 = vpop.permute.xlu0 %1829
    %1831 = vrot.lane.b32.xlu0 %v1826, 64
    %v1832 = vpop.permute.xlu0 %1831
    %v1835 = vadd.f32 %v1775, %v1830
    %v1836 = vadd.f32 %v1777, %v1832
    %v1837 = vtanh.pop %v1835
    %v1838 = vtanh.pop %v1836
    %v1839 = vsub.f32 1.0, %v1801
    %v1840 = vsub.f32 1.0, %v1816
    %1843 = vrot.lane.b32.xlu0 %v1837, 96
    %v1844 = vpop.permute.xlu0 %1843
    %1845 = vrot.lane.b32.xlu0 %v1838, 96
    %v1846 = vpop.permute.xlu0 %1845
    %v1849 = vmul.f32 %v1839, %v1844
    %v1850 = vmul.f32 %v1840, %v1846
    %v1851 = vmul.f32 %v1801, %v1597
    %v1852 = vmul.f32 %v1816, %v1598
    %v1853 = vadd.f32 %v1849, %v1851
    %v1854 = vadd.f32 %v1850, %v1852
    %v1855 = vpack.c.bf16 %v1854, %v1853
    %1857 = vrot.lane.b32.xlu0 %v1855, 96
    %v1858 = vpop.permute.xlu0 %1857
    %v1860 = vsel %vm87, %v1858, 0
    %1862 = vmatpush.bf16.msra.mxu0 0
    %1863 = vmatpush.bf16.msra.mxu0 0
    %1864 = vmatpush.bf16.msra.mxu0 0
    %1865 = vmatpush.bf16.msra.mxu0 0
    %1866 = vmatpush.bf16.msra.mxu0 0
    %1867 = vmatpush.bf16.msra.mxu0 0
    %1868 = vmatpush.bf16.msra.mxu0 %v401
    %1869 = vmatpush.bf16.msra.mxu0 %v400
    %1870 = vmatmul.bf16.gmra.mxu0 %v1860
    %v1871 = vpop.f32.mrf.mxu0
    %v1872 = vadd.f32 %v56, %v1871
    %v1873 = vpop.f32.mrf.mxu0
    %v1874 = vadd.f32 %v56, %v1873
    %1875 = vdwg.mxu0
    %v1876 = vmax.f32 %v1872, 0.0
    %v1877 = vmax.f32 %v1874, 0.0
    %v1878 = vpack.c.bf16 %v1877, %v1876
    %v1880 = vsel %vm87, %v1878, 0
    %1882 = vmatpush.bf16.msra.mxu0 0
    %1883 = vmatpush.bf16.msra.mxu0 0
    %1884 = vmatpush.bf16.msra.mxu0 0
    %1885 = vmatpush.bf16.msra.mxu0 0
    %1886 = vmatpush.bf16.msra.mxu0 0
    %1887 = vmatpush.bf16.msra.mxu0 0
    %1888 = vmatpush.bf16.msra.mxu0 %v433
    %1889 = vmatpush.bf16.msra.mxu0 %v432
    %1890 = vmatmul.bf16.gmra.mxu0 %v1880
    %v1891 = vpop.f32.mrf.mxu0
    %v1892 = vadd.f32 %v438, %v1891
    %v1893 = vpop.f32.mrf.mxu0
    %v1894 = vadd.f32 %v438, %v1893
    %1895 = vdwg.mxu0
    %v1896 = vmax.f32 %v1892, 0.0
    %v1897 = vmax.f32 %v1894, 0.0
    %v1898 = vpack.c.bf16 %v1897, %v1896
    %v1900 = vsel %vm87, %v1898, 0
    %1902 = vmatpush.bf16.msra.mxu0 0
    %1903 = vmatpush.bf16.msra.mxu0 0
    %1904 = vmatpush.bf16.msra.mxu0 0
    %1905 = vmatpush.bf16.msra.mxu0 0
    %1906 = vmatpush.bf16.msra.mxu0 0
    %1907 = vmatpush.bf16.msra.mxu0 0
    %1908 = vmatpush.bf16.msra.mxu0 %v469
    %1909 = vmatpush.bf16.msra.mxu0 %v468
    %1910 = vmatmul.bf16.gmra.mxu0 %v1900
    %v1911 = vpop.f32.mrf.mxu0
    %v1912 = vadd.f32 %v473, %v1911
    %v1913 = vpop.f32.mrf.mxu0
    %v1914 = vadd.f32 %v473, %v1913
    %1915 = vdwg.mxu0
    %v1916 = vadd.f32 %v1660, %v1912
    %v1917 = vadd.f32 %v1661, %v1914
    %s1918 = scalar_lea.vmem [#allocation3], 96
    %1919 = vst.msk [vmem:[%s1918] sm:$0xff] %vm87, %v1916
    %1920 = vst.msk [vmem:[%s1918 + $0x8] sm:$0xff] %vm87, %v1917
    // Predicated region
    $region22: #{tpu_custom_call.1} parent=1 // pred_check
      _
    $region23: #{tpu_custom_call.1} parent=1 // pred_check_branch
      %1922 = sbr.rel (0) target = $region25
    $region24: #{tpu_custom_call.1} parent=1 // pred_region
      %1924 = vsyncadd [#allocation4], 0
      %s1925 = sshll.u32 [#allocation3], 4
      %s1926 = int_to_ptr.vmem [resolvable:$true] %s1925
      %s1927 = sshll.u32 %s5, 4
      %s1928 = int_to_ptr.hbm [resolvable:$true] %s1927
      %1933 = dma.vmem_to_hbm [thread:$0]  %s1926, 1792, %s1928, [#allocation4], 128, 128, 8
    $region25: #{tpu_custom_call.1} parent=1 // pred_fallthru
      _
    // Predicated region
    $region26: #{tpu_custom_call.1} parent=1 // pred_check
      _
    $region27: #{tpu_custom_call.1} parent=1 // pred_check_branch
      %1935 = sbr.rel (0) target = $region29
    $region28: #{tpu_custom_call.1} parent=1 // pred_region
      %1937 = dma.done [#allocation4], 1792
    $region29: #{tpu_custom_call.1} parent=1 // pred_fallthru
      _
    %1938 = vsyncpa [#allocation4], 1

</llo_original>
